<compile_context>
chip_gen: v5e
topology: v5e:2x2
jax: 0.10.0
libtpu: 0.0.40
codegen_flags: <defaults>
</compile_context>

<pallas_src>
import jax
import jax.numpy as jnp
from jax import lax
from jax.experimental import pallas as pl
from jax.experimental.pallas import tpu as pltpu

NUM_CAT1 = 6     # EmbNN.num_categories1
NUM_CAT2 = 146   # EmbNN.num_categories2
_LANE = 128
_SUBLANE = 8


def _round_up(x, m):
    return (x + m - 1) // m * m


def _first_argmax_idx(scores, ncat):
    """Index of the first (lowest-index) max along axis 1 (== torch.argmax).

    An all-NaN row yields the sentinel `ncat` (maps to a zero table row /
    out-of-range column, i.e. an all-zero contribution).
    """
    iota = lax.broadcasted_iota(jnp.int32, scores.shape, 1)
    row_max = jnp.max(scores, axis=1, keepdims=True)
    return jnp.min(jnp.where(scores == row_max, iota, ncat), axis=1, keepdims=True)


def embnn_kernel(cts_ref, smls_ref, tbl_ref, w2b_ref, out_ref):
    # Static layout facts recovered from the (static) ref shapes.
    k_total = tbl_ref.shape[0]               # t1_rows (8) + NUM_CAT2 (146) = 154
    t1_rows = k_total - NUM_CAT2              # sublane-aligned start of T2
    embed = w2b_ref.shape[0] - 1               # last row of w2b is the bias b2
    tb = out_ref.shape[0]

    # First-argmax indices of both score tiles.
    idx1 = _first_argmax_idx(cts_ref[...], NUM_CAT1)     # (TB, 1) in [0, 6]
    idx2 = _first_argmax_idx(smls_ref[...], NUM_CAT2)    # (TB, 1) in [0, 146]

    # Single fused "two-hot": column idx1 selects a T1 row (b1 folded in),
    # column t1_rows+idx2 selects a T2 row.  Sentinel indices hit a zero row /
    # fall out of range -> zero contribution (NaN caveat above).
    kiota = lax.broadcasted_iota(jnp.int32, (tb, k_total), 1)
    twohot = jnp.logical_or(kiota == idx1,
                            kiota == t1_rows + idx2).astype(jnp.float32)

    # Embedding gather + concat + Linear1 as one MXU pass, then ReLU.
    # Dropout(p=0) is the identity.
    h = jnp.dot(twohot, tbl_ref[...], preferred_element_type=jnp.float32)
    h = jnp.maximum(h, 0.0)

    # Linear2 with the unpadded (embed, out_dim) weights; output stays at out_dim.
    w2 = w2b_ref[0:embed, :]                              # (embed, out_dim)
    b2 = w2b_ref[embed:embed + 1, :]                      # (1, out_dim)
    out_ref[...] = jnp.dot(h, w2, preferred_element_type=jnp.float32) + b2


def fold_params(params):
    """Fold embeddings through Linear1 and pack constants into two small arrays."""
    e1, e2 = params["e1"], params["e2"]
    ct_emb = e1.shape[1]
    w1, b1 = params["w1"], params["b1"]
    w2, b2 = params["w2"], params["b2"]
    out_dim = w2.shape[1]

    # Exact fold: one-hot rows sum to 1, so b1 can live inside T1.
    t1 = e1 @ w1[:ct_emb] + b1.reshape(1, -1)             # (6, embed)
    t2 = e2 @ w1[ct_emb:]                                 # (146, embed)
    t1_rows = _round_up(NUM_CAT1, _SUBLANE)               # sublane-align T2's start
    tbl = jnp.concatenate(
        [jnp.pad(t1, ((0, t1_rows - NUM_CAT1), (0, 0))), t2], axis=0)  # (154, embed)

    # Linear2 weights + bias packed (NO lane padding of out_dim).
    w2b = jnp.concatenate([w2, b2.reshape(1, -1)], axis=0)             # (embed+1, out_dim)
    return tbl, w2b, out_dim


def embnn_forward(cts, smlss, tbl, w2b, out_dim, *, tb=1024):
    B = cts.shape[0]
    embed = w2b.shape[0] - 1
    k_total = tbl.shape[0]

    # Batch tile: sublane-aligned, never larger than needed; ragged tail handled
    # by Pallas (grid = cdiv, masked final stores).
    tb_eff = _round_up(max(1, min(tb, B)), _SUBLANE)
    n_tiles = pl.cdiv(B, tb_eff)

    # VMEM budget per grid step (lane-padded layouts, double-buffered I/O plus
    # two-hot / h intermediates), with 2x headroom; capped for v7x (64 MiB/core).
    per_row_vmem = 4 * (2 * (_LANE + 2 * _LANE + _LANE) + 2 * _LANE + _LANE)
    vmem_limit = int(min(48 << 20, max(24 << 20, 2 * tb_eff * per_row_vmem)))

    flops = 2 * B * (k_total * embed + embed * out_dim)
    bytes_accessed = 4 * (B * (NUM_CAT1 + NUM_CAT2 + out_dim) + tbl.size + w2b.size)

    return pl.pallas_call(
        embnn_kernel,
        out_shape=jax.ShapeDtypeStruct((B, out_dim), jnp.float32),
        grid_spec=pltpu.PrefetchScalarGridSpec(
            num_scalar_prefetch=0,
            grid=(n_tiles,),
            in_specs=[
                pl.BlockSpec((tb_eff, NUM_CAT1), lambda i: (i, 0)),
                pl.BlockSpec((tb_eff, NUM_CAT2), lambda i: (i, 0)),
                # Constants: same block every step -> fetched once, kept resident.
                pl.BlockSpec(tbl.shape, lambda i: (0, 0)),
                pl.BlockSpec(w2b.shape, lambda i: (0, 0)),
            ],
            out_specs=pl.BlockSpec((tb_eff, out_dim), lambda i: (i, 0)),
        ),
        compiler_params=pltpu.CompilerParams(
            dimension_semantics=("parallel",),   # megacore split of batch tiles on v7x
            vmem_limit_bytes=vmem_limit,
        ),
        cost_estimate=pl.CostEstimate(
            flops=flops, transcendentals=0, bytes_accessed=bytes_accessed),
    )(cts, smlss, tbl, w2b)


def embnn_reference(cts, smlss, params):
    """Pure-JAX reference mirroring the PyTorch forward exactly."""
    ct_idx = jnp.argmax(cts, axis=1)
    sm_idx = jnp.argmax(smlss, axis=1)
    x = jnp.concatenate([params["e1"][ct_idx], params["e2"][sm_idx]], axis=1)
    h = jnp.maximum(x @ params["w1"] + params["b1"].reshape(1, -1), 0.0)
    return h @ params["w2"] + params["b2"].reshape(1, -1)


if __name__ == "__main__":
    # config: ct_emb_size=8, smls_emb_size=24, embed_size=32, out_dim=16
    ct_emb, smls_emb, embed_size, out_dim = 8, 24, 32, 16
    B = 300   # small batch, not a multiple of the tile -> exercises the ragged tail
    TB = 128  # small tile so the test runs multiple pipelined grid steps

    key = jax.random.PRNGKey(0)
    ks = jax.random.split(key, 8)
    params = {
        "e1": jax.random.normal(ks[0], (NUM_CAT1, ct_emb), jnp.float32),
        "e2": jax.random.normal(ks[1], (NUM_CAT2, smls_emb), jnp.float32),
        # Linear weights stored as (in_features, out_features): y = x @ W + b.
        "w1": 0.1 * jax.random.normal(ks[2], (ct_emb + smls_emb, embed_size), jnp.float32),
        "b1": 0.1 * jax.random.normal(ks[3], (embed_size,), jnp.float32),
        "w2": 0.1 * jax.random.normal(ks[4], (embed_size, out_dim), jnp.float32),
        "b2": 0.1 * jax.random.normal(ks[5], (out_dim,), jnp.float32),
    }
    cts = jax.random.normal(ks[6], (B, NUM_CAT1), jnp.float32)
    smlss = jax.random.normal(ks[7], (B, NUM_CAT2), jnp.float32)

    tbl, w2b, odim = fold_params(params)
    out = embnn_forward(cts, smlss, tbl, w2b, odim, tb=TB)
    jax.block_until_ready(out)

    ref = embnn_reference(cts, smlss, params)
    assert out.shape == (B, out_dim), out.shape
    max_err = float(jnp.max(jnp.abs(out - ref)))
    assert jnp.allclose(out, ref, atol=2e-5, rtol=2e-5), f"mismatch vs reference: {max_err}"
    print("KERNEL_OK")
</pallas_src>

<mosaic_0001>
module attributes {stable_mosaic.version = 11 : i64} {
  func.func @embnn_kernel(%arg0: i32, %arg1: memref<128x6xf32, #tpu.memory_space<vmem>>, %arg2: memref<128x146xf32, #tpu.memory_space<vmem>>, %arg3: memref<154x32xf32, #tpu.memory_space<vmem>>, %arg4: memref<33x16xf32, #tpu.memory_space<vmem>>, %arg5: memref<128x16xf32, #tpu.memory_space<vmem>>) attributes {dimension_semantics = [#tpu.dimension_semantics<parallel>], iteration_bounds = array<i64: 3>, scalar_prefetch = 0 : i64, scratch_operands = 0 : i64, tpu.core_type = #tpu.core_type<tc>, window_params = [{transform_indices = @transform_0, window_bounds = array<i64: 128, 6>}, {transform_indices = @transform_1, window_bounds = array<i64: 128, 146>}, {pipeline_mode = #tpu.pipeline_mode<synchronous>, transform_indices = @transform_2, window_bounds = array<i64: 154, 32>}, {pipeline_mode = #tpu.pipeline_mode<synchronous>, transform_indices = @transform_3, window_bounds = array<i64: 33, 16>}, {transform_indices = @transform_4, window_bounds = array<i64: 128, 16>}]} {
    %c0 = arith.constant 0 : index
    %c0_0 = arith.constant 0 : index
    %0 = vector.load %arg1[%c0, %c0_0] : memref<128x6xf32, #tpu.memory_space<vmem>>, vector<128x6xf32>
    %1 = tpu.iota {dimensions = array<i32: 1>} : vector<128x6xi32>
    %cst = arith.constant dense<0xFF800000> : vector<128xf32>
    %2 = vector.multi_reduction <maximumf>, %0, %cst [1] : vector<128x6xf32> to vector<128xf32>
    %3 = vector.shape_cast %2 : vector<128xf32> to vector<128x1xf32>
    %4 = vector.broadcast %3 : vector<128x1xf32> to vector<128x6xf32>
    %5 = arith.cmpf oeq, %0, %4 : vector<128x6xf32>
    %c6_i32 = arith.constant 6 : i32
    %6 = vector.broadcast %c6_i32 : i32 to vector<128x6xi32>
    %7 = arith.select %5, %1, %6 : vector<128x6xi1>, vector<128x6xi32>
    %cst_1 = arith.constant dense<2147483647> : vector<128xi32>
    %8 = vector.multi_reduction <minsi>, %7, %cst_1 [1] : vector<128x6xi32> to vector<128xi32>
    %9 = vector.shape_cast %8 : vector<128xi32> to vector<128x1xi32>
    %c0_2 = arith.constant 0 : index
    %c0_3 = arith.constant 0 : index
    %10 = vector.load %arg2[%c0_2, %c0_3] : memref<128x146xf32, #tpu.memory_space<vmem>>, vector<128x146xf32>
    %11 = tpu.iota {dimensions = array<i32: 1>} : vector<128x146xi32>
    %cst_4 = arith.constant dense<0xFF800000> : vector<128xf32>
    %12 = vector.multi_reduction <maximumf>, %10, %cst_4 [1] : vector<128x146xf32> to vector<128xf32>
    %13 = vector.shape_cast %12 : vector<128xf32> to vector<128x1xf32>
    %14 = vector.broadcast %13 : vector<128x1xf32> to vector<128x146xf32>
    %15 = arith.cmpf oeq, %10, %14 : vector<128x146xf32>
    %c146_i32 = arith.constant 146 : i32
    %16 = vector.broadcast %c146_i32 : i32 to vector<128x146xi32>
    %17 = arith.select %15, %11, %16 : vector<128x146xi1>, vector<128x146xi32>
    %cst_5 = arith.constant dense<2147483647> : vector<128xi32>
    %18 = vector.multi_reduction <minsi>, %17, %cst_5 [1] : vector<128x146xi32> to vector<128xi32>
    %19 = vector.shape_cast %18 : vector<128xi32> to vector<128x1xi32>
    %20 = tpu.iota {dimensions = array<i32: 1>} : vector<128x154xi32>
    %21 = vector.broadcast %9 : vector<128x1xi32> to vector<128x154xi32>
    %22 = arith.cmpi eq, %20, %21 : vector<128x154xi32>
    %c8_i32 = arith.constant 8 : i32
    %23 = vector.broadcast %c8_i32 : i32 to vector<128x1xi32>
    %24 = arith.addi %23, %19 : vector<128x1xi32>
    %25 = vector.broadcast %24 : vector<128x1xi32> to vector<128x154xi32>
    %26 = arith.cmpi eq, %20, %25 : vector<128x154xi32>
    %27 = arith.ori %22, %26 : vector<128x154xi1>
    %28 = arith.extui %27 : vector<128x154xi1> to vector<128x154xi32>
    %29 = arith.sitofp %28 : vector<128x154xi32> to vector<128x154xf32>
    %c0_6 = arith.constant 0 : index
    %c0_7 = arith.constant 0 : index
    %30 = vector.load %arg3[%c0_6, %c0_7] : memref<154x32xf32, #tpu.memory_space<vmem>>, vector<154x32xf32>
    %cst_8 = arith.constant dense<0.000000e+00> : vector<128x32xf32>
    %31 = tpu.matmul %29, %30, %cst_8 {dimension_numbers = #tpu.dot_dimension_numbers<[1], [0], [0], [1], [0, 0, 1, 1], [], []>} : vector<128x154xf32>, vector<154x32xf32>, vector<128x32xf32> -> vector<128x32xf32>
    %cst_9 = arith.constant 0.000000e+00 : f32
    %32 = vector.broadcast %cst_9 : f32 to vector<128x32xf32>
    %33 = arith.maximumf %31, %32 : vector<128x32xf32>
    %c0_10 = arith.constant 0 : index
    %c0_11 = arith.constant 0 : index
    %34 = vector.load %arg4[%c0_10, %c0_11] : memref<33x16xf32, #tpu.memory_space<vmem>>, vector<32x16xf32>
    %c32 = arith.constant 32 : index
    %c0_12 = arith.constant 0 : index
    %35 = vector.load %arg4[%c32, %c0_12] : memref<33x16xf32, #tpu.memory_space<vmem>>, vector<1x16xf32>
    %cst_13 = arith.constant dense<0.000000e+00> : vector<128x16xf32>
    %36 = tpu.matmul %33, %34, %cst_13 {dimension_numbers = #tpu.dot_dimension_numbers<[1], [0], [0], [1], [0, 0, 1, 1], [], []>} : vector<128x32xf32>, vector<32x16xf32>, vector<128x16xf32> -> vector<128x16xf32>
    %37 = vector.broadcast %35 : vector<1x16xf32> to vector<128x16xf32>
    %38 = arith.addf %36, %37 : vector<128x16xf32>
    %c0_14 = arith.constant 0 : index
    %c0_15 = arith.constant 0 : index
    %39 = vector.load %arg5[%c0_14, %c0_15] : memref<128x16xf32, #tpu.memory_space<vmem>>, vector<128x16xf32>
    tpu.vector_store %arg5[%c0_14, %c0_15], %38 {strides = array<i32>} : memref<128x16xf32, #tpu.memory_space<vmem>>, vector<128x16xf32>,
    return
  }
  func.func @transform_0(%arg0: i32) -> (i32, i32) {
    %c0_i32 = arith.constant 0 : i32
    %c0_i32_0 = arith.constant 0 : i32
    return %arg0, %c0_i32 : i32, i32
  }
  func.func @transform_1(%arg0: i32) -> (i32, i32) {
    %c0_i32 = arith.constant 0 : i32
    %c0_i32_0 = arith.constant 0 : i32
    return %arg0, %c0_i32 : i32, i32
  }
  func.func @transform_2(%arg0: i32) -> (i32, i32) {
    %c0_i32 = arith.constant 0 : i32
    %c0_i32_0 = arith.constant 0 : i32
    %c0_i32_1 = arith.constant 0 : i32
    return %c0_i32, %c0_i32_0 : i32, i32
  }
  func.func @transform_3(%arg0: i32) -> (i32, i32) {
    %c0_i32 = arith.constant 0 : i32
    %c0_i32_0 = arith.constant 0 : i32
    %c0_i32_1 = arith.constant 0 : i32
    return %c0_i32, %c0_i32_0 : i32, i32
  }
  func.func @transform_4(%arg0: i32) -> (i32, i32) {
    %c0_i32 = arith.constant 0 : i32
    %c0_i32_0 = arith.constant 0 : i32
    return %arg0, %c0_i32 : i32, i32
  }
}

</mosaic_0001>

<llo_original>
// kernel: tpu_custom_call.1
$region0: #{tpu_custom_call.1}
  #allocation0 [shape = 'u32[]', space=smem, size = 0x4, offset = 0x4, fixed_abs, tag = 'smem constant byte address 0x4 - core index']
  #allocation1 [shape = 'u32[72,128]{1,0:T(1,128)}', space=vmem, size = 0x9000, scoped, tag = 'internal scratch']
  %s0 = inlined_call_operand.vmem [shape: f32[300,6], index: 0, kind: input, shape index: {}]
  %s1 = inlined_call_operand.vmem [shape: f32[300,146], index: 1, kind: input, shape index: {}]
  %s2 = inlined_call_operand.vmem [shape: f32[154,32], index: 2, kind: input, shape index: {}]
  %s3 = inlined_call_operand.vmem [shape: f32[33,16], index: 3, kind: input, shape index: {}]
  %s4 = inlined_call_operand.vmem [shape: f32[300,16], index: 4, kind: output, shape index: {}]
  %s5 = sld [smem:[#allocation0]]
  $region97: #{tpu_custom_call.1} parent=0
    _
  %s7 = ssub.s32 1, %s5
  %s8 = scalar_select 0, %s7, %s5
  $region1: #{tpu_custom_call.1} parent=0
    #allocation2 [shape = 'u8[131072]{0}', space=vmem, size = 0x20000, scoped, tag = 'output window, operand 0']
    loop: start=0, step=1, limit=5
    $region2: #{tpu_custom_call.1} parent=1 // loop_pre_header
      _
    $region3: #{tpu_custom_call.1} parent=1 // loop_header
      %s10 = sphi 0, %s14
      %p11 = scmp.ge.s32.totalorder %s10, 5
      %s20 = sphi 0, %s22
      %s23 = sphi 0, %s20
      %s24 = sphi 0, %s23
      %s40 = sphi 0, %s24
      %s46 = sphi 0, %s48
      %s49 = sphi 0, %s46
      %s50 = sphi 0, %s49
      %s66 = sphi 0, %s50
      %s70 = sphi 0, %s70
      %s72 = sphi 0, %s70
      %s73 = sphi 0, %s72
      %s87 = sphi 0, %s73
      %s91 = sphi 0, %s91
      %s93 = sphi 0, %s91
      %s94 = sphi 0, %s93
      %s108 = sphi 0, %s94
      %s114 = sphi 0, %s116
      %s117 = sphi 0, %s114
      %s118 = sphi 0, %s117
      %s134 = sphi 0, %s118
    $region4: #{tpu_custom_call.1} parent=1 // loop_header_branch
      %13 = sbr.rel (%p11) target = $region8
    $region5: #{tpu_custom_call.1} parent=1 // loop_body
      %s15 = ssub.s32 %s10, 1
      %s16 = ssub.s32 %s10, 2
      %s17 = sadd.s32 %s10, 1
      %s18 = ssub.s32 %s10, %s17
      %p19 = scmp.eq.s32.totalorder %s18, 0
      %s21 = sadd.s32 %s20, 1
      %s22 = scalar_select %p19, %s20, %s21
      %p25 = pneg %p19
      %p26 = scmp.eq.s32.totalorder %s10, 2
      %p27 = por %p25, %p26
      %p28 = scmp.ne.s32.totalorder %s20, %s23
      %p29 = scmp.eq.s32.totalorder %s10, 0
      %p30 = por %p28, %p29
      %p31 = scmp.ne.s32.totalorder %s20, %s23
      %p32 = scmp.eq.s32.totalorder %s15, 2
      %p33 = por %p31, %p32
      %p34 = scmp.ne.s32.totalorder %s23, %s24
      %p35 = scmp.eq.s32.totalorder %s15, 0
      %p36 = por %p34, %p35
      %p37 = scmp.ne.s32.totalorder %s23, %s24
      %p38 = scmp.eq.s32.totalorder %s16, 2
      %p39 = por %p37, %p38
      %p41 = scmp.ne.s32.totalorder %s24, %s40
      %p42 = scmp.eq.s32.totalorder %s16, 0
      %p43 = por %p41, %p42
      %s44 = ssub.s32 %s10, %s17
      %p45 = scmp.eq.s32.totalorder %s44, 0
      %s47 = sadd.s32 %s46, 1
      %s48 = scalar_select %p45, %s46, %s47
      %p51 = pneg %p45
      %p52 = scmp.eq.s32.totalorder %s10, 2
      %p53 = por %p51, %p52
      %p54 = scmp.ne.s32.totalorder %s46, %s49
      %p55 = scmp.eq.s32.totalorder %s10, 0
      %p56 = por %p54, %p55
      %p57 = scmp.ne.s32.totalorder %s46, %s49
      %p58 = scmp.eq.s32.totalorder %s15, 2
      %p59 = por %p57, %p58
      %p60 = scmp.ne.s32.totalorder %s49, %s50
      %p61 = scmp.eq.s32.totalorder %s15, 0
      %p62 = por %p60, %p61
      %p63 = scmp.ne.s32.totalorder %s49, %s50
      %p64 = scmp.eq.s32.totalorder %s16, 2
      %p65 = por %p63, %p64
      %p67 = scmp.ne.s32.totalorder %s50, %s66
      %p68 = scmp.eq.s32.totalorder %s16, 0
      %p69 = por %p67, %p68
      %s71 = sadd.s32 %s70, 1
      %p74 = scmp.eq.s32.totalorder %s10, 2
      %p75 = scmp.ne.s32.totalorder %s70, %s72
      %p76 = scmp.eq.s32.totalorder %s10, 0
      %p77 = por %p75, %p76
      %p78 = scmp.ne.s32.totalorder %s70, %s72
      %p79 = scmp.eq.s32.totalorder %s15, 2
      %p80 = por %p78, %p79
      %p81 = scmp.ne.s32.totalorder %s72, %s73
      %p82 = scmp.eq.s32.totalorder %s15, 0
      %p83 = por %p81, %p82
      %p84 = scmp.ne.s32.totalorder %s72, %s73
      %p85 = scmp.eq.s32.totalorder %s16, 2
      %p86 = por %p84, %p85
      %p88 = scmp.ne.s32.totalorder %s73, %s87
      %p89 = scmp.eq.s32.totalorder %s16, 0
      %p90 = por %p88, %p89
      %s92 = sadd.s32 %s91, 1
      %p95 = scmp.eq.s32.totalorder %s10, 2
      %p96 = scmp.ne.s32.totalorder %s91, %s93
      %p97 = scmp.eq.s32.totalorder %s10, 0
      %p98 = por %p96, %p97
      %p99 = scmp.ne.s32.totalorder %s91, %s93
      %p100 = scmp.eq.s32.totalorder %s15, 2
      %p101 = por %p99, %p100
      %p102 = scmp.ne.s32.totalorder %s93, %s94
      %p103 = scmp.eq.s32.totalorder %s15, 0
      %p104 = por %p102, %p103
      %p105 = scmp.ne.s32.totalorder %s93, %s94
      %p106 = scmp.eq.s32.totalorder %s16, 2
      %p107 = por %p105, %p106
      %p109 = scmp.ne.s32.totalorder %s94, %s108
      %p110 = scmp.eq.s32.totalorder %s16, 0
      %p111 = por %p109, %p110
      %s112 = ssub.s32 %s10, %s17
      %p113 = scmp.eq.s32.totalorder %s112, 0
      %s115 = sadd.s32 %s114, 1
      %s116 = scalar_select %p113, %s114, %s115
      %p119 = pneg %p113
      %p120 = scmp.eq.s32.totalorder %s10, 2
      %p121 = por %p119, %p120
      %p122 = scmp.ne.s32.totalorder %s114, %s117
      %p123 = scmp.eq.s32.totalorder %s10, 0
      %p124 = por %p122, %p123
      %p125 = scmp.ne.s32.totalorder %s114, %s117
      %p126 = scmp.eq.s32.totalorder %s15, 2
      %p127 = por %p125, %p126
      %p128 = scmp.ne.s32.totalorder %s117, %s118
      %p129 = scmp.eq.s32.totalorder %s15, 0
      %p130 = por %p128, %p129
      %p131 = scmp.ne.s32.totalorder %s117, %s118
      %p132 = scmp.eq.s32.totalorder %s16, 2
      %p133 = por %p131, %p132
      %p135 = scmp.ne.s32.totalorder %s118, %s134
      %p136 = scmp.eq.s32.totalorder %s16, 0
      %p137 = por %p135, %p136
      %p138 = scmp.le.s32.totalorder 1, %s10
      %p139 = scmp.lt.s32.totalorder %s10, 4
      %p140 = pnand %p138, %p139
      %p141 = pneg %p140
      // Predicated region
      $region9: #{tpu_custom_call.1} parent=5 // pred_check
        _
      $region10: #{tpu_custom_call.1} parent=5 // pred_check_branch
        %143 = sbr.rel (%p140) target = $region12
      $region11: #{tpu_custom_call.1} parent=5 // pred_region
        %s144 = ssub.s32 %s10, 1
        // Predicated region
        $region13: #{tpu_custom_call.1} parent=11 // pred_check
          %p145 = pneg %p83
        $region14: #{tpu_custom_call.1} parent=11 // pred_check_branch
          %147 = sbr.rel (%p145) target = $region16
        $region15: #{tpu_custom_call.1} parent=11 // pred_region
          _
        $region16: #{tpu_custom_call.1} parent=11 // pred_fallthru
          _
        // Predicated region
        $region17: #{tpu_custom_call.1} parent=11 // pred_check
          %p148 = pneg %p104
        $region18: #{tpu_custom_call.1} parent=11 // pred_check_branch
          %150 = sbr.rel (%p148) target = $region20
        $region19: #{tpu_custom_call.1} parent=11 // pred_region
          _
        $region20: #{tpu_custom_call.1} parent=11 // pred_fallthru
          _
      $region12: #{tpu_custom_call.1} parent=5 // pred_fallthru
        _
      %p151 = scmp.lt.s32.totalorder %s10, 3
      // Predicated region
      $region21: #{tpu_custom_call.1} parent=5 // pred_check
        %p152 = pneg %p151
      $region22: #{tpu_custom_call.1} parent=5 // pred_check_branch
        %154 = sbr.rel (%p152) target = $region24
      $region23: #{tpu_custom_call.1} parent=5 // pred_region
        // Predicated region
        $region25: #{tpu_custom_call.1} parent=23 // pred_check
          %p155 = pneg %p30
        $region26: #{tpu_custom_call.1} parent=23 // pred_check_branch
          %157 = sbr.rel (%p155) target = $region28
        $region27: #{tpu_custom_call.1} parent=23 // pred_region
          %s158 = smul.u32 16, %s10
          %s159 = ssub.s32 38, %s158
          %p160 = scmp.lt.s32.totalorder %s159, 16
          %s161 = scalar_select %p160, %s159, 16
          %s162 = smul.u32 8, %s161
          %p163 = scmp.lt.s32.totalorder %s158, 37
          %s164 = scalar_select %p163, %s158, 37
          %s165 = smul.addr %s164, 8
          %s166 = scalar_lea.vmem %s0, %s165
          %s167 = smul.u32 16, %s10
          %s168 = ssub.s32 38, %s167
          %p169 = scmp.lt.s32.totalorder %s168, 16
          %s170 = scalar_select %p169, %s168, 16
          %s171 = smul.u32 8, %s170
        $region28: #{tpu_custom_call.1} parent=23 // pred_fallthru
          _
        // Predicated region
        $region29: #{tpu_custom_call.1} parent=23 // pred_check
          %p172 = pneg %p56
        $region30: #{tpu_custom_call.1} parent=23 // pred_check_branch
          %174 = sbr.rel (%p172) target = $region32
        $region31: #{tpu_custom_call.1} parent=23 // pred_region
          %s175 = smul.u32 16, %s10
          %s176 = ssub.s32 38, %s175
          %p177 = scmp.lt.s32.totalorder %s176, 16
          %s178 = scalar_select %p177, %s176, 16
          %s179 = smul.u32 8, %s178
          %s180 = smul.u32 %s179, 2
          %p181 = scmp.lt.s32.totalorder %s175, 37
          %s182 = scalar_select %p181, %s175, 37
          %s183 = smul.addr %s182, 2
          %s184 = smul.addr %s183, 8
          %s185 = scalar_lea.vmem %s1, %s184
          %s186 = smul.u32 16, %s10
          %s187 = ssub.s32 38, %s186
          %p188 = scmp.lt.s32.totalorder %s187, 16
          %s189 = scalar_select %p188, %s187, 16
          %s190 = smul.u32 8, %s189
          %s191 = smul.u32 %s190, 2
        $region32: #{tpu_custom_call.1} parent=23 // pred_fallthru
          _
      $region24: #{tpu_custom_call.1} parent=5 // pred_fallthru
        _
      %p192 = scmp.le.s32.totalorder 1, %s10
      %p193 = scmp.lt.s32.totalorder %s10, 4
      %p194 = pnand %p192, %p193
      %p195 = pneg %p194
      // Predicated region
      $region33: #{tpu_custom_call.1} parent=5 // pred_check
        _
      $region34: #{tpu_custom_call.1} parent=5 // pred_check_branch
        %197 = sbr.rel (%p194) target = $region36
      $region35: #{tpu_custom_call.1} parent=5 // pred_region
        %s198 = ssub.s32 %s10, 1
        %s199 = smul.u32 16, %s15
        %s200 = ssub.s32 38, %s199
        %p201 = scmp.lt.s32.totalorder %s200, 16
        %s202 = scalar_select %p201, %s200, 16
        %s203 = smul.u32 8, %s202
        %p204 = scmp.lt.s32.totalorder %s199, 37
        %s205 = scalar_select %p204, %s199, 37
        %s206 = smul.addr %s205, 8
        %s207 = scalar_lea.vmem %s0, %s206
        %p208 = pneg %p36
        %p209 = pneg %p33
        %s210 = smul.u32 16, %s15
        %s211 = ssub.s32 38, %s210
        %p212 = scmp.lt.s32.totalorder %s211, 16
        %s213 = scalar_select %p212, %s211, 16
        %s214 = smul.u32 8, %s213
        %s215 = smul.u32 %s214, 2
        %p216 = scmp.lt.s32.totalorder %s210, 37
        %s217 = scalar_select %p216, %s210, 37
        %s218 = smul.addr %s217, 2
        %s219 = smul.addr %s218, 8
        %s220 = scalar_lea.vmem %s1, %s219
        %p221 = pneg %p62
        %p222 = pneg %p59
        %p223 = pneg %p83
        %p224 = pneg %p80
        %p225 = pneg %p104
        %p226 = pneg %p101
        %p227 = pneg %p130
        %p228 = pneg %p127
        %s229 = sand.u32 %s117, 1
        %s230 = sand.u32 %s117, 1
        %s231 = smul.addr %s230, 128
        %s232 = scalar_lea.vmem [#allocation2], %s231
        %s233 = smul.u32 16, %s15
        %s234 = ssub.s32 38, %s233
        %p235 = scmp.lt.s32.totalorder %s234, 16
        %s236 = scalar_select %p235, %s234, 16
        %s237 = smul.u32 8, %s236
        %p238 = scmp.lt.s32.totalorder %s233, 37
        %s239 = scalar_select %p238, %s233, 37
        %s240 = smul.addr %s239, 8
        %s241 = scalar_lea.vmem %s0, %s240
        %s242 = smul.u32 16, %s15
        %s243 = ssub.s32 38, %s242
        %p244 = scmp.lt.s32.totalorder %s243, 16
        %s245 = scalar_select %p244, %s243, 16
        %s246 = smul.u32 8, %s245
        %s247 = smul.u32 16, %s15
        %s248 = ssub.s32 38, %s247
        %p249 = scmp.lt.s32.totalorder %s248, 16
        %s250 = scalar_select %p249, %s248, 16
        %s251 = smul.u32 8, %s250
        %s252 = smul.u32 %s251, 2
        %p253 = scmp.lt.s32.totalorder %s247, 37
        %s254 = scalar_select %p253, %s247, 37
        %s255 = smul.addr %s254, 2
        %s256 = smul.addr %s255, 8
        %s257 = scalar_lea.vmem %s1, %s256
        %s258 = smul.u32 16, %s15
        %s259 = ssub.s32 38, %s258
        %p260 = scmp.lt.s32.totalorder %s259, 16
        %s261 = scalar_select %p260, %s259, 16
        %s262 = smul.u32 8, %s261
        %s263 = smul.u32 %s262, 2
        %s264 = smul.u32 16, %s15
        %s265 = ssub.s32 38, %s264
        %p266 = scmp.lt.s32.totalorder %s265, 16
        %s267 = scalar_select %p266, %s265, 16
        %s268 = smul.u32 8, %s267
        %v269 = vld [vmem:[%s241] sm:$0xff]
        %v270 = vld [vmem:[%s241 + $0x8] sm:$0xff]
        %v271 = vld [vmem:[%s241 + $0x10] sm:$0xff]
        %v272 = vld [vmem:[%s241 + $0x18] sm:$0xff]
        %v273 = vld [vmem:[%s241 + $0x20] sm:$0xff]
        %v274 = vld [vmem:[%s241 + $0x28] sm:$0xff]
        %v275 = vld [vmem:[%s241 + $0x30] sm:$0xff]
        %v276 = vld [vmem:[%s241 + $0x38] sm:$0xff]
        %v277 = vld [vmem:[%s241 + $0x40] sm:$0xff]
        %v278 = vld [vmem:[%s241 + $0x48] sm:$0xff]
        %v279 = vld [vmem:[%s241 + $0x50] sm:$0xff]
        %v280 = vld [vmem:[%s241 + $0x58] sm:$0xff]
        %v281 = vld [vmem:[%s241 + $0x60] sm:$0xff]
        %v282 = vld [vmem:[%s241 + $0x68] sm:$0xff]
        %v283 = vld [vmem:[%s241 + $0x70] sm:$0xff]
        %v284 = vld [vmem:[%s241 + $0x78] sm:$0xff]
        %v285 = vlaneseq
        %v286 = vand.u32 %v285, 127
        %vm287 = vcmask 48128
        %v288 = vsel %vm287, %v269, -inf
        %289 = vmax.xlane.f32.xlu0 %v288
        %v290 = vpop.xlane.xlu0 %289
        %v291 = vsel %vm287, %v270, -inf
        %292 = vmax.xlane.f32.xlu0 %v291
        %v293 = vpop.xlane.xlu0 %292
        %v294 = vsel %vm287, %v271, -inf
        %295 = vmax.xlane.f32.xlu0 %v294
        %v296 = vpop.xlane.xlu0 %295
        %v297 = vsel %vm287, %v272, -inf
        %298 = vmax.xlane.f32.xlu0 %v297
        %v299 = vpop.xlane.xlu0 %298
        %v300 = vsel %vm287, %v273, -inf
        %301 = vmax.xlane.f32.xlu0 %v300
        %v302 = vpop.xlane.xlu0 %301
        %v303 = vsel %vm287, %v274, -inf
        %304 = vmax.xlane.f32.xlu0 %v303
        %v305 = vpop.xlane.xlu0 %304
        %v306 = vsel %vm287, %v275, -inf
        %307 = vmax.xlane.f32.xlu0 %v306
        %v308 = vpop.xlane.xlu0 %307
        %v309 = vsel %vm287, %v276, -inf
        %310 = vmax.xlane.f32.xlu0 %v309
        %v311 = vpop.xlane.xlu0 %310
        %v312 = vsel %vm287, %v277, -inf
        %313 = vmax.xlane.f32.xlu0 %v312
        %v314 = vpop.xlane.xlu0 %313
        %v315 = vsel %vm287, %v278, -inf
        %316 = vmax.xlane.f32.xlu0 %v315
        %v317 = vpop.xlane.xlu0 %316
        %v318 = vsel %vm287, %v279, -inf
        %319 = vmax.xlane.f32.xlu0 %v318
        %v320 = vpop.xlane.xlu0 %319
        %v321 = vsel %vm287, %v280, -inf
        %322 = vmax.xlane.f32.xlu0 %v321
        %v323 = vpop.xlane.xlu0 %322
        %v324 = vsel %vm287, %v281, -inf
        %325 = vmax.xlane.f32.xlu0 %v324
        %v326 = vpop.xlane.xlu0 %325
        %v327 = vsel %vm287, %v282, -inf
        %328 = vmax.xlane.f32.xlu0 %v327
        %v329 = vpop.xlane.xlu0 %328
        %v330 = vsel %vm287, %v283, -inf
        %331 = vmax.xlane.f32.xlu0 %v330
        %v332 = vpop.xlane.xlu0 %331
        %v333 = vsel %vm287, %v284, -inf
        %334 = vmax.xlane.f32.xlu0 %v333
        %v335 = vpop.xlane.xlu0 %334
        %vm336 = vcmp.eq.f32.partialorder %v269, %v290
        %vm337 = vcmp.eq.f32.partialorder %v270, %v293
        %vm338 = vcmp.eq.f32.partialorder %v271, %v296
        %vm339 = vcmp.eq.f32.partialorder %v272, %v299
        %vm340 = vcmp.eq.f32.partialorder %v273, %v302
        %vm341 = vcmp.eq.f32.partialorder %v274, %v305
        %vm342 = vcmp.eq.f32.partialorder %v275, %v308
        %vm343 = vcmp.eq.f32.partialorder %v276, %v311
        %vm344 = vcmp.eq.f32.partialorder %v277, %v314
        %vm345 = vcmp.eq.f32.partialorder %v278, %v317
        %vm346 = vcmp.eq.f32.partialorder %v279, %v320
        %vm347 = vcmp.eq.f32.partialorder %v280, %v323
        %vm348 = vcmp.eq.f32.partialorder %v281, %v326
        %vm349 = vcmp.eq.f32.partialorder %v282, %v329
        %vm350 = vcmp.eq.f32.partialorder %v283, %v332
        %vm351 = vcmp.eq.f32.partialorder %v284, %v335
        %v352 = vsel %vm336, %v286, 6
        %v353 = vsel %vm337, %v286, 6
        %v354 = vsel %vm338, %v286, 6
        %v355 = vsel %vm339, %v286, 6
        %v356 = vsel %vm340, %v286, 6
        %v357 = vsel %vm341, %v286, 6
        %v358 = vsel %vm342, %v286, 6
        %v359 = vsel %vm343, %v286, 6
        %v360 = vsel %vm344, %v286, 6
        %v361 = vsel %vm345, %v286, 6
        %v362 = vsel %vm346, %v286, 6
        %v363 = vsel %vm347, %v286, 6
        %v364 = vsel %vm348, %v286, 6
        %v365 = vsel %vm349, %v286, 6
        %v366 = vsel %vm350, %v286, 6
        %v367 = vsel %vm351, %v286, 6
        %v368 = vsel %vm287, %v352, 2147483647
        %v369 = vand.u32 %v368, 65535
        %v370 = vshra.s32 %v368, 16
        %v371 = vcvt.s32.f32 %v369
        %v372 = vcvt.s32.f32 %v370
        %373 = vmin.xlane.f32.xlu0 %v372
        %v374 = vpop.xlane.xlu0 %373
        %vm375 = vcmp.eq.f32.partialorder %v372, %v374
        %v376 = vsel %vm375, %v371, inf
        %377 = vmin.xlane.f32.xlu0 %v376
        %v378 = vpop.xlane.xlu0 %377
        %v379 = vcvt.f32.s32 %v378
        %v380 = vcvt.f32.s32 %v374
        %v381 = vshll.u32 %v380, 16
        %v382 = vadd.s32 %v381, %v379
        %v383 = vsel %vm287, %v353, 2147483647
        %v384 = vand.u32 %v383, 65535
        %v385 = vshra.s32 %v383, 16
        %v386 = vcvt.s32.f32 %v384
        %v387 = vcvt.s32.f32 %v385
        %388 = vmin.xlane.f32.xlu0 %v387
        %v389 = vpop.xlane.xlu0 %388
        %vm390 = vcmp.eq.f32.partialorder %v387, %v389
        %v391 = vsel %vm390, %v386, inf
        %392 = vmin.xlane.f32.xlu0 %v391
        %v393 = vpop.xlane.xlu0 %392
        %v394 = vcvt.f32.s32 %v393
        %v395 = vcvt.f32.s32 %v389
        %v396 = vshll.u32 %v395, 16
        %v397 = vadd.s32 %v396, %v394
        %v398 = vsel %vm287, %v354, 2147483647
        %v399 = vand.u32 %v398, 65535
        %v400 = vshra.s32 %v398, 16
        %v401 = vcvt.s32.f32 %v399
        %v402 = vcvt.s32.f32 %v400
        %403 = vmin.xlane.f32.xlu0 %v402
        %v404 = vpop.xlane.xlu0 %403
        %vm405 = vcmp.eq.f32.partialorder %v402, %v404
        %v406 = vsel %vm405, %v401, inf
        %407 = vmin.xlane.f32.xlu0 %v406
        %v408 = vpop.xlane.xlu0 %407
        %v409 = vcvt.f32.s32 %v408
        %v410 = vcvt.f32.s32 %v404
        %v411 = vshll.u32 %v410, 16
        %v412 = vadd.s32 %v411, %v409
        %v413 = vsel %vm287, %v355, 2147483647
        %v414 = vand.u32 %v413, 65535
        %v415 = vshra.s32 %v413, 16
        %v416 = vcvt.s32.f32 %v414
        %v417 = vcvt.s32.f32 %v415
        %418 = vmin.xlane.f32.xlu0 %v417
        %v419 = vpop.xlane.xlu0 %418
        %vm420 = vcmp.eq.f32.partialorder %v417, %v419
        %v421 = vsel %vm420, %v416, inf
        %422 = vmin.xlane.f32.xlu0 %v421
        %v423 = vpop.xlane.xlu0 %422
        %v424 = vcvt.f32.s32 %v423
        %v425 = vcvt.f32.s32 %v419
        %v426 = vshll.u32 %v425, 16
        %v427 = vadd.s32 %v426, %v424
        %v428 = vsel %vm287, %v356, 2147483647
        %v429 = vand.u32 %v428, 65535
        %v430 = vshra.s32 %v428, 16
        %v431 = vcvt.s32.f32 %v429
        %v432 = vcvt.s32.f32 %v430
        %433 = vmin.xlane.f32.xlu0 %v432
        %v434 = vpop.xlane.xlu0 %433
        %vm435 = vcmp.eq.f32.partialorder %v432, %v434
        %v436 = vsel %vm435, %v431, inf
        %437 = vmin.xlane.f32.xlu0 %v436
        %v438 = vpop.xlane.xlu0 %437
        %v439 = vcvt.f32.s32 %v438
        %v440 = vcvt.f32.s32 %v434
        %v441 = vshll.u32 %v440, 16
        %v442 = vadd.s32 %v441, %v439
        %v443 = vsel %vm287, %v357, 2147483647
        %v444 = vand.u32 %v443, 65535
        %v445 = vshra.s32 %v443, 16
        %v446 = vcvt.s32.f32 %v444
        %v447 = vcvt.s32.f32 %v445
        %448 = vmin.xlane.f32.xlu0 %v447
        %v449 = vpop.xlane.xlu0 %448
        %vm450 = vcmp.eq.f32.partialorder %v447, %v449
        %v451 = vsel %vm450, %v446, inf
        %452 = vmin.xlane.f32.xlu0 %v451
        %v453 = vpop.xlane.xlu0 %452
        %v454 = vcvt.f32.s32 %v453
        %v455 = vcvt.f32.s32 %v449
        %v456 = vshll.u32 %v455, 16
        %v457 = vadd.s32 %v456, %v454
        %v458 = vsel %vm287, %v358, 2147483647
        %v459 = vand.u32 %v458, 65535
        %v460 = vshra.s32 %v458, 16
        %v461 = vcvt.s32.f32 %v459
        %v462 = vcvt.s32.f32 %v460
        %463 = vmin.xlane.f32.xlu0 %v462
        %v464 = vpop.xlane.xlu0 %463
        %vm465 = vcmp.eq.f32.partialorder %v462, %v464
        %v466 = vsel %vm465, %v461, inf
        %467 = vmin.xlane.f32.xlu0 %v466
        %v468 = vpop.xlane.xlu0 %467
        %v469 = vcvt.f32.s32 %v468
        %v470 = vcvt.f32.s32 %v464
        %v471 = vshll.u32 %v470, 16
        %v472 = vadd.s32 %v471, %v469
        %v473 = vsel %vm287, %v359, 2147483647
        %v474 = vand.u32 %v473, 65535
        %v475 = vshra.s32 %v473, 16
        %v476 = vcvt.s32.f32 %v474
        %v477 = vcvt.s32.f32 %v475
        %478 = vmin.xlane.f32.xlu0 %v477
        %v479 = vpop.xlane.xlu0 %478
        %vm480 = vcmp.eq.f32.partialorder %v477, %v479
        %v481 = vsel %vm480, %v476, inf
        %482 = vmin.xlane.f32.xlu0 %v481
        %v483 = vpop.xlane.xlu0 %482
        %v484 = vcvt.f32.s32 %v483
        %v485 = vcvt.f32.s32 %v479
        %v486 = vshll.u32 %v485, 16
        %v487 = vadd.s32 %v486, %v484
        %v488 = vsel %vm287, %v360, 2147483647
        %v489 = vand.u32 %v488, 65535
        %v490 = vshra.s32 %v488, 16
        %v491 = vcvt.s32.f32 %v489
        %v492 = vcvt.s32.f32 %v490
        %493 = vmin.xlane.f32.xlu0 %v492
        %v494 = vpop.xlane.xlu0 %493
        %vm495 = vcmp.eq.f32.partialorder %v492, %v494
        %v496 = vsel %vm495, %v491, inf
        %497 = vmin.xlane.f32.xlu0 %v496
        %v498 = vpop.xlane.xlu0 %497
        %v499 = vcvt.f32.s32 %v498
        %v500 = vcvt.f32.s32 %v494
        %v501 = vshll.u32 %v500, 16
        %v502 = vadd.s32 %v501, %v499
        %v503 = vsel %vm287, %v361, 2147483647
        %v504 = vand.u32 %v503, 65535
        %v505 = vshra.s32 %v503, 16
        %v506 = vcvt.s32.f32 %v504
        %v507 = vcvt.s32.f32 %v505
        %508 = vmin.xlane.f32.xlu0 %v507
        %v509 = vpop.xlane.xlu0 %508
        %vm510 = vcmp.eq.f32.partialorder %v507, %v509
        %v511 = vsel %vm510, %v506, inf
        %512 = vmin.xlane.f32.xlu0 %v511
        %v513 = vpop.xlane.xlu0 %512
        %v514 = vcvt.f32.s32 %v513
        %v515 = vcvt.f32.s32 %v509
        %v516 = vshll.u32 %v515, 16
        %v517 = vadd.s32 %v516, %v514
        %v518 = vsel %vm287, %v362, 2147483647
        %v519 = vand.u32 %v518, 65535
        %v520 = vshra.s32 %v518, 16
        %v521 = vcvt.s32.f32 %v519
        %v522 = vcvt.s32.f32 %v520
        %523 = vmin.xlane.f32.xlu0 %v522
        %v524 = vpop.xlane.xlu0 %523
        %vm525 = vcmp.eq.f32.partialorder %v522, %v524
        %v526 = vsel %vm525, %v521, inf
        %527 = vmin.xlane.f32.xlu0 %v526
        %v528 = vpop.xlane.xlu0 %527
        %v529 = vcvt.f32.s32 %v528
        %v530 = vcvt.f32.s32 %v524
        %v531 = vshll.u32 %v530, 16
        %v532 = vadd.s32 %v531, %v529
        %v533 = vsel %vm287, %v363, 2147483647
        %v534 = vand.u32 %v533, 65535
        %v535 = vshra.s32 %v533, 16
        %v536 = vcvt.s32.f32 %v534
        %v537 = vcvt.s32.f32 %v535
        %538 = vmin.xlane.f32.xlu0 %v537
        %v539 = vpop.xlane.xlu0 %538
        %vm540 = vcmp.eq.f32.partialorder %v537, %v539
        %v541 = vsel %vm540, %v536, inf
        %542 = vmin.xlane.f32.xlu0 %v541
        %v543 = vpop.xlane.xlu0 %542
        %v544 = vcvt.f32.s32 %v543
        %v545 = vcvt.f32.s32 %v539
        %v546 = vshll.u32 %v545, 16
        %v547 = vadd.s32 %v546, %v544
        %v548 = vsel %vm287, %v364, 2147483647
        %v549 = vand.u32 %v548, 65535
        %v550 = vshra.s32 %v548, 16
        %v551 = vcvt.s32.f32 %v549
        %v552 = vcvt.s32.f32 %v550
        %553 = vmin.xlane.f32.xlu0 %v552
        %v554 = vpop.xlane.xlu0 %553
        %vm555 = vcmp.eq.f32.partialorder %v552, %v554
        %v556 = vsel %vm555, %v551, inf
        %557 = vmin.xlane.f32.xlu0 %v556
        %v558 = vpop.xlane.xlu0 %557
        %v559 = vcvt.f32.s32 %v558
        %v560 = vcvt.f32.s32 %v554
        %v561 = vshll.u32 %v560, 16
        %v562 = vadd.s32 %v561, %v559
        %v563 = vsel %vm287, %v365, 2147483647
        %v564 = vand.u32 %v563, 65535
        %v565 = vshra.s32 %v563, 16
        %v566 = vcvt.s32.f32 %v564
        %v567 = vcvt.s32.f32 %v565
        %568 = vmin.xlane.f32.xlu0 %v567
        %v569 = vpop.xlane.xlu0 %568
        %vm570 = vcmp.eq.f32.partialorder %v567, %v569
        %v571 = vsel %vm570, %v566, inf
        %572 = vmin.xlane.f32.xlu0 %v571
        %v573 = vpop.xlane.xlu0 %572
        %v574 = vcvt.f32.s32 %v573
        %v575 = vcvt.f32.s32 %v569
        %v576 = vshll.u32 %v575, 16
        %v577 = vadd.s32 %v576, %v574
        %v578 = vsel %vm287, %v366, 2147483647
        %v579 = vand.u32 %v578, 65535
        %v580 = vshra.s32 %v578, 16
        %v581 = vcvt.s32.f32 %v579
        %v582 = vcvt.s32.f32 %v580
        %583 = vmin.xlane.f32.xlu0 %v582
        %v584 = vpop.xlane.xlu0 %583
        %vm585 = vcmp.eq.f32.partialorder %v582, %v584
        %v586 = vsel %vm585, %v581, inf
        %587 = vmin.xlane.f32.xlu0 %v586
        %v588 = vpop.xlane.xlu0 %587
        %v589 = vcvt.f32.s32 %v588
        %v590 = vcvt.f32.s32 %v584
        %v591 = vshll.u32 %v590, 16
        %v592 = vadd.s32 %v591, %v589
        %v593 = vsel %vm287, %v367, 2147483647
        %v594 = vand.u32 %v593, 65535
        %v595 = vshra.s32 %v593, 16
        %v596 = vcvt.s32.f32 %v594
        %v597 = vcvt.s32.f32 %v595
        %598 = vmin.xlane.f32.xlu0 %v597
        %v599 = vpop.xlane.xlu0 %598
        %vm600 = vcmp.eq.f32.partialorder %v597, %v599
        %v601 = vsel %vm600, %v596, inf
        %602 = vmin.xlane.f32.xlu0 %v601
        %v603 = vpop.xlane.xlu0 %602
        %v604 = vcvt.f32.s32 %v603
        %v605 = vcvt.f32.s32 %v599
        %v606 = vshll.u32 %v605, 16
        %v607 = vadd.s32 %v606, %v604
        %v608 = vld [vmem:[%s257] sm:$0xff]
        %v609 = vld [vmem:[%s257 + $0x8] sm:$0xff]
        %v610 = vld [vmem:[%s257 + $0x10] sm:$0xff]
        %v611 = vld [vmem:[%s257 + $0x18] sm:$0xff]
        %v612 = vld [vmem:[%s257 + $0x20] sm:$0xff]
        %v613 = vld [vmem:[%s257 + $0x28] sm:$0xff]
        %v614 = vld [vmem:[%s257 + $0x30] sm:$0xff]
        %v615 = vld [vmem:[%s257 + $0x38] sm:$0xff]
        %v616 = vld [vmem:[%s257 + $0x40] sm:$0xff]
        %v617 = vld [vmem:[%s257 + $0x48] sm:$0xff]
        %v618 = vld [vmem:[%s257 + $0x50] sm:$0xff]
        %v619 = vld [vmem:[%s257 + $0x58] sm:$0xff]
        %v620 = vld [vmem:[%s257 + $0x60] sm:$0xff]
        %v621 = vld [vmem:[%s257 + $0x68] sm:$0xff]
        %v622 = vld [vmem:[%s257 + $0x70] sm:$0xff]
        %v623 = vld [vmem:[%s257 + $0x78] sm:$0xff]
        %v624 = vld [vmem:[%s257 + $0x80] sm:$0xff]
        %v625 = vld [vmem:[%s257 + $0x88] sm:$0xff]
        %v626 = vld [vmem:[%s257 + $0x90] sm:$0xff]
        %v627 = vld [vmem:[%s257 + $0x98] sm:$0xff]
        %v628 = vld [vmem:[%s257 + $0xa0] sm:$0xff]
        %v629 = vld [vmem:[%s257 + $0xa8] sm:$0xff]
        %v630 = vld [vmem:[%s257 + $0xb0] sm:$0xff]
        %v631 = vld [vmem:[%s257 + $0xb8] sm:$0xff]
        %v632 = vld [vmem:[%s257 + $0xc0] sm:$0xff]
        %v633 = vld [vmem:[%s257 + $0xc8] sm:$0xff]
        %v634 = vld [vmem:[%s257 + $0xd0] sm:$0xff]
        %v635 = vld [vmem:[%s257 + $0xd8] sm:$0xff]
        %v636 = vld [vmem:[%s257 + $0xe0] sm:$0xff]
        %v637 = vld [vmem:[%s257 + $0xe8] sm:$0xff]
        %v638 = vld [vmem:[%s257 + $0xf0] sm:$0xff]
        %v639 = vld [vmem:[%s257 + $0xf8] sm:$0xff]
        %v640 = vadd.s32 %v286, 128
        %vm641 = vcmask 146432
        %v642 = vsel %vm641, %v609, -inf
        %v643 = vmax.f32 %v608, %v642
        %644 = vmax.xlane.f32.xlu0 %v643
        %v645 = vpop.xlane.xlu0 %644
        %v646 = vsel %vm641, %v611, -inf
        %v647 = vmax.f32 %v610, %v646
        %648 = vmax.xlane.f32.xlu0 %v647
        %v649 = vpop.xlane.xlu0 %648
        %v650 = vsel %vm641, %v613, -inf
        %v651 = vmax.f32 %v612, %v650
        %652 = vmax.xlane.f32.xlu0 %v651
        %v653 = vpop.xlane.xlu0 %652
        %v654 = vsel %vm641, %v615, -inf
        %v655 = vmax.f32 %v614, %v654
        %656 = vmax.xlane.f32.xlu0 %v655
        %v657 = vpop.xlane.xlu0 %656
        %v658 = vsel %vm641, %v617, -inf
        %v659 = vmax.f32 %v616, %v658
        %660 = vmax.xlane.f32.xlu0 %v659
        %v661 = vpop.xlane.xlu0 %660
        %v662 = vsel %vm641, %v619, -inf
        %v663 = vmax.f32 %v618, %v662
        %664 = vmax.xlane.f32.xlu0 %v663
        %v665 = vpop.xlane.xlu0 %664
        %v666 = vsel %vm641, %v621, -inf
        %v667 = vmax.f32 %v620, %v666
        %668 = vmax.xlane.f32.xlu0 %v667
        %v669 = vpop.xlane.xlu0 %668
        %v670 = vsel %vm641, %v623, -inf
        %v671 = vmax.f32 %v622, %v670
        %672 = vmax.xlane.f32.xlu0 %v671
        %v673 = vpop.xlane.xlu0 %672
        %v674 = vsel %vm641, %v625, -inf
        %v675 = vmax.f32 %v624, %v674
        %676 = vmax.xlane.f32.xlu0 %v675
        %v677 = vpop.xlane.xlu0 %676
        %v678 = vsel %vm641, %v627, -inf
        %v679 = vmax.f32 %v626, %v678
        %680 = vmax.xlane.f32.xlu0 %v679
        %v681 = vpop.xlane.xlu0 %680
        %v682 = vsel %vm641, %v629, -inf
        %v683 = vmax.f32 %v628, %v682
        %684 = vmax.xlane.f32.xlu0 %v683
        %v685 = vpop.xlane.xlu0 %684
        %v686 = vsel %vm641, %v631, -inf
        %v687 = vmax.f32 %v630, %v686
        %688 = vmax.xlane.f32.xlu0 %v687
        %v689 = vpop.xlane.xlu0 %688
        %v690 = vsel %vm641, %v633, -inf
        %v691 = vmax.f32 %v632, %v690
        %692 = vmax.xlane.f32.xlu0 %v691
        %v693 = vpop.xlane.xlu0 %692
        %v694 = vsel %vm641, %v635, -inf
        %v695 = vmax.f32 %v634, %v694
        %696 = vmax.xlane.f32.xlu0 %v695
        %v697 = vpop.xlane.xlu0 %696
        %v698 = vsel %vm641, %v637, -inf
        %v699 = vmax.f32 %v636, %v698
        %700 = vmax.xlane.f32.xlu0 %v699
        %v701 = vpop.xlane.xlu0 %700
        %v702 = vsel %vm641, %v639, -inf
        %v703 = vmax.f32 %v638, %v702
        %704 = vmax.xlane.f32.xlu0 %v703
        %v705 = vpop.xlane.xlu0 %704
        %vm706 = vcmp.eq.f32.partialorder %v608, %v645
        %vm707 = vcmp.eq.f32.partialorder %v609, %v645
        %vm708 = vcmp.eq.f32.partialorder %v610, %v649
        %vm709 = vcmp.eq.f32.partialorder %v611, %v649
        %vm710 = vcmp.eq.f32.partialorder %v612, %v653
        %vm711 = vcmp.eq.f32.partialorder %v613, %v653
        %vm712 = vcmp.eq.f32.partialorder %v614, %v657
        %vm713 = vcmp.eq.f32.partialorder %v615, %v657
        %vm714 = vcmp.eq.f32.partialorder %v616, %v661
        %vm715 = vcmp.eq.f32.partialorder %v617, %v661
        %vm716 = vcmp.eq.f32.partialorder %v618, %v665
        %vm717 = vcmp.eq.f32.partialorder %v619, %v665
        %vm718 = vcmp.eq.f32.partialorder %v620, %v669
        %vm719 = vcmp.eq.f32.partialorder %v621, %v669
        %vm720 = vcmp.eq.f32.partialorder %v622, %v673
        %vm721 = vcmp.eq.f32.partialorder %v623, %v673
        %vm722 = vcmp.eq.f32.partialorder %v624, %v677
        %vm723 = vcmp.eq.f32.partialorder %v625, %v677
        %vm724 = vcmp.eq.f32.partialorder %v626, %v681
        %vm725 = vcmp.eq.f32.partialorder %v627, %v681
        %vm726 = vcmp.eq.f32.partialorder %v628, %v685
        %vm727 = vcmp.eq.f32.partialorder %v629, %v685
        %vm728 = vcmp.eq.f32.partialorder %v630, %v689
        %vm729 = vcmp.eq.f32.partialorder %v631, %v689
        %vm730 = vcmp.eq.f32.partialorder %v632, %v693
        %vm731 = vcmp.eq.f32.partialorder %v633, %v693
        %vm732 = vcmp.eq.f32.partialorder %v634, %v697
        %vm733 = vcmp.eq.f32.partialorder %v635, %v697
        %vm734 = vcmp.eq.f32.partialorder %v636, %v701
        %vm735 = vcmp.eq.f32.partialorder %v637, %v701
        %vm736 = vcmp.eq.f32.partialorder %v638, %v705
        %vm737 = vcmp.eq.f32.partialorder %v639, %v705
        %v738 = vsel %vm706, %v286, 146
        %v739 = vsel %vm707, %v640, 146
        %v740 = vsel %vm708, %v286, 146
        %v741 = vsel %vm709, %v640, 146
        %v742 = vsel %vm710, %v286, 146
        %v743 = vsel %vm711, %v640, 146
        %v744 = vsel %vm712, %v286, 146
        %v745 = vsel %vm713, %v640, 146
        %v746 = vsel %vm714, %v286, 146
        %v747 = vsel %vm715, %v640, 146
        %v748 = vsel %vm716, %v286, 146
        %v749 = vsel %vm717, %v640, 146
        %v750 = vsel %vm718, %v286, 146
        %v751 = vsel %vm719, %v640, 146
        %v752 = vsel %vm720, %v286, 146
        %v753 = vsel %vm721, %v640, 146
        %v754 = vsel %vm722, %v286, 146
        %v755 = vsel %vm723, %v640, 146
        %v756 = vsel %vm724, %v286, 146
        %v757 = vsel %vm725, %v640, 146
        %v758 = vsel %vm726, %v286, 146
        %v759 = vsel %vm727, %v640, 146
        %v760 = vsel %vm728, %v286, 146
        %v761 = vsel %vm729, %v640, 146
        %v762 = vsel %vm730, %v286, 146
        %v763 = vsel %vm731, %v640, 146
        %v764 = vsel %vm732, %v286, 146
        %v765 = vsel %vm733, %v640, 146
        %v766 = vsel %vm734, %v286, 146
        %v767 = vsel %vm735, %v640, 146
        %v768 = vsel %vm736, %v286, 146
        %v769 = vsel %vm737, %v640, 146
        %v770 = vsel %vm641, %v739, 2147483647
        %vm771 = vcmp.lt.s32.totalorder %v738, %v770
        %v772 = vsel %vm771, %v738, %v770
        %v773 = vand.u32 %v772, 65535
        %v774 = vshra.s32 %v772, 16
        %v775 = vcvt.s32.f32 %v773
        %v776 = vcvt.s32.f32 %v774
        %777 = vmin.xlane.f32.xlu0 %v776
        %v778 = vpop.xlane.xlu0 %777
        %vm779 = vcmp.eq.f32.partialorder %v776, %v778
        %v780 = vsel %vm779, %v775, inf
        %781 = vmin.xlane.f32.xlu0 %v780
        %v782 = vpop.xlane.xlu0 %781
        %v783 = vcvt.f32.s32 %v782
        %v784 = vcvt.f32.s32 %v778
        %v785 = vshll.u32 %v784, 16
        %v786 = vadd.s32 %v785, %v783
        %v787 = vsel %vm641, %v741, 2147483647
        %vm788 = vcmp.lt.s32.totalorder %v740, %v787
        %v789 = vsel %vm788, %v740, %v787
        %v790 = vand.u32 %v789, 65535
        %v791 = vshra.s32 %v789, 16
        %v792 = vcvt.s32.f32 %v790
        %v793 = vcvt.s32.f32 %v791
        %794 = vmin.xlane.f32.xlu0 %v793
        %v795 = vpop.xlane.xlu0 %794
        %vm796 = vcmp.eq.f32.partialorder %v793, %v795
        %v797 = vsel %vm796, %v792, inf
        %798 = vmin.xlane.f32.xlu0 %v797
        %v799 = vpop.xlane.xlu0 %798
        %v800 = vcvt.f32.s32 %v799
        %v801 = vcvt.f32.s32 %v795
        %v802 = vshll.u32 %v801, 16
        %v803 = vadd.s32 %v802, %v800
        %v804 = vsel %vm641, %v743, 2147483647
        %vm805 = vcmp.lt.s32.totalorder %v742, %v804
        %v806 = vsel %vm805, %v742, %v804
        %v807 = vand.u32 %v806, 65535
        %v808 = vshra.s32 %v806, 16
        %v809 = vcvt.s32.f32 %v807
        %v810 = vcvt.s32.f32 %v808
        %811 = vmin.xlane.f32.xlu0 %v810
        %v812 = vpop.xlane.xlu0 %811
        %vm813 = vcmp.eq.f32.partialorder %v810, %v812
        %v814 = vsel %vm813, %v809, inf
        %815 = vmin.xlane.f32.xlu0 %v814
        %v816 = vpop.xlane.xlu0 %815
        %v817 = vcvt.f32.s32 %v816
        %v818 = vcvt.f32.s32 %v812
        %v819 = vshll.u32 %v818, 16
        %v820 = vadd.s32 %v819, %v817
        %v821 = vsel %vm641, %v745, 2147483647
        %vm822 = vcmp.lt.s32.totalorder %v744, %v821
        %v823 = vsel %vm822, %v744, %v821
        %v824 = vand.u32 %v823, 65535
        %v825 = vshra.s32 %v823, 16
        %v826 = vcvt.s32.f32 %v824
        %v827 = vcvt.s32.f32 %v825
        %828 = vmin.xlane.f32.xlu0 %v827
        %v829 = vpop.xlane.xlu0 %828
        %vm830 = vcmp.eq.f32.partialorder %v827, %v829
        %v831 = vsel %vm830, %v826, inf
        %832 = vmin.xlane.f32.xlu0 %v831
        %v833 = vpop.xlane.xlu0 %832
        %v834 = vcvt.f32.s32 %v833
        %v835 = vcvt.f32.s32 %v829
        %v836 = vshll.u32 %v835, 16
        %v837 = vadd.s32 %v836, %v834
        %v838 = vsel %vm641, %v747, 2147483647
        %vm839 = vcmp.lt.s32.totalorder %v746, %v838
        %v840 = vsel %vm839, %v746, %v838
        %v841 = vand.u32 %v840, 65535
        %v842 = vshra.s32 %v840, 16
        %v843 = vcvt.s32.f32 %v841
        %v844 = vcvt.s32.f32 %v842
        %845 = vmin.xlane.f32.xlu0 %v844
        %v846 = vpop.xlane.xlu0 %845
        %vm847 = vcmp.eq.f32.partialorder %v844, %v846
        %v848 = vsel %vm847, %v843, inf
        %849 = vmin.xlane.f32.xlu0 %v848
        %v850 = vpop.xlane.xlu0 %849
        %v851 = vcvt.f32.s32 %v850
        %v852 = vcvt.f32.s32 %v846
        %v853 = vshll.u32 %v852, 16
        %v854 = vadd.s32 %v853, %v851
        %v855 = vsel %vm641, %v749, 2147483647
        %vm856 = vcmp.lt.s32.totalorder %v748, %v855
        %v857 = vsel %vm856, %v748, %v855
        %v858 = vand.u32 %v857, 65535
        %v859 = vshra.s32 %v857, 16
        %v860 = vcvt.s32.f32 %v858
        %v861 = vcvt.s32.f32 %v859
        %862 = vmin.xlane.f32.xlu0 %v861
        %v863 = vpop.xlane.xlu0 %862
        %vm864 = vcmp.eq.f32.partialorder %v861, %v863
        %v865 = vsel %vm864, %v860, inf
        %866 = vmin.xlane.f32.xlu0 %v865
        %v867 = vpop.xlane.xlu0 %866
        %v868 = vcvt.f32.s32 %v867
        %v869 = vcvt.f32.s32 %v863
        %v870 = vshll.u32 %v869, 16
        %v871 = vadd.s32 %v870, %v868
        %v872 = vsel %vm641, %v751, 2147483647
        %vm873 = vcmp.lt.s32.totalorder %v750, %v872
        %v874 = vsel %vm873, %v750, %v872
        %v875 = vand.u32 %v874, 65535
        %v876 = vshra.s32 %v874, 16
        %v877 = vcvt.s32.f32 %v875
        %v878 = vcvt.s32.f32 %v876
        %879 = vmin.xlane.f32.xlu0 %v878
        %v880 = vpop.xlane.xlu0 %879
        %vm881 = vcmp.eq.f32.partialorder %v878, %v880
        %v882 = vsel %vm881, %v877, inf
        %883 = vmin.xlane.f32.xlu0 %v882
        %v884 = vpop.xlane.xlu0 %883
        %v885 = vcvt.f32.s32 %v884
        %v886 = vcvt.f32.s32 %v880
        %v887 = vshll.u32 %v886, 16
        %v888 = vadd.s32 %v887, %v885
        %v889 = vsel %vm641, %v753, 2147483647
        %vm890 = vcmp.lt.s32.totalorder %v752, %v889
        %v891 = vsel %vm890, %v752, %v889
        %v892 = vand.u32 %v891, 65535
        %v893 = vshra.s32 %v891, 16
        %v894 = vcvt.s32.f32 %v892
        %v895 = vcvt.s32.f32 %v893
        %896 = vmin.xlane.f32.xlu0 %v895
        %v897 = vpop.xlane.xlu0 %896
        %vm898 = vcmp.eq.f32.partialorder %v895, %v897
        %v899 = vsel %vm898, %v894, inf
        %900 = vmin.xlane.f32.xlu0 %v899
        %v901 = vpop.xlane.xlu0 %900
        %v902 = vcvt.f32.s32 %v901
        %v903 = vcvt.f32.s32 %v897
        %v904 = vshll.u32 %v903, 16
        %v905 = vadd.s32 %v904, %v902
        %v906 = vsel %vm641, %v755, 2147483647
        %vm907 = vcmp.lt.s32.totalorder %v754, %v906
        %v908 = vsel %vm907, %v754, %v906
        %v909 = vand.u32 %v908, 65535
        %v910 = vshra.s32 %v908, 16
        %v911 = vcvt.s32.f32 %v909
        %v912 = vcvt.s32.f32 %v910
        %913 = vmin.xlane.f32.xlu0 %v912
        %v914 = vpop.xlane.xlu0 %913
        %vm915 = vcmp.eq.f32.partialorder %v912, %v914
        %v916 = vsel %vm915, %v911, inf
        %917 = vmin.xlane.f32.xlu0 %v916
        %v918 = vpop.xlane.xlu0 %917
        %v919 = vcvt.f32.s32 %v918
        %v920 = vcvt.f32.s32 %v914
        %v921 = vshll.u32 %v920, 16
        %v922 = vadd.s32 %v921, %v919
        %v923 = vsel %vm641, %v757, 2147483647
        %vm924 = vcmp.lt.s32.totalorder %v756, %v923
        %v925 = vsel %vm924, %v756, %v923
        %v926 = vand.u32 %v925, 65535
        %v927 = vshra.s32 %v925, 16
        %v928 = vcvt.s32.f32 %v926
        %v929 = vcvt.s32.f32 %v927
        %930 = vmin.xlane.f32.xlu0 %v929
        %v931 = vpop.xlane.xlu0 %930
        %vm932 = vcmp.eq.f32.partialorder %v929, %v931
        %v933 = vsel %vm932, %v928, inf
        %934 = vmin.xlane.f32.xlu0 %v933
        %v935 = vpop.xlane.xlu0 %934
        %v936 = vcvt.f32.s32 %v935
        %v937 = vcvt.f32.s32 %v931
        %v938 = vshll.u32 %v937, 16
        %v939 = vadd.s32 %v938, %v936
        %v940 = vsel %vm641, %v759, 2147483647
        %vm941 = vcmp.lt.s32.totalorder %v758, %v940
        %v942 = vsel %vm941, %v758, %v940
        %v943 = vand.u32 %v942, 65535
        %v944 = vshra.s32 %v942, 16
        %v945 = vcvt.s32.f32 %v943
        %v946 = vcvt.s32.f32 %v944
        %947 = vmin.xlane.f32.xlu0 %v946
        %v948 = vpop.xlane.xlu0 %947
        %vm949 = vcmp.eq.f32.partialorder %v946, %v948
        %v950 = vsel %vm949, %v945, inf
        %951 = vmin.xlane.f32.xlu0 %v950
        %v952 = vpop.xlane.xlu0 %951
        %v953 = vcvt.f32.s32 %v952
        %v954 = vcvt.f32.s32 %v948
        %v955 = vshll.u32 %v954, 16
        %v956 = vadd.s32 %v955, %v953
        %v957 = vsel %vm641, %v761, 2147483647
        %vm958 = vcmp.lt.s32.totalorder %v760, %v957
        %v959 = vsel %vm958, %v760, %v957
        %v960 = vand.u32 %v959, 65535
        %v961 = vshra.s32 %v959, 16
        %v962 = vcvt.s32.f32 %v960
        %v963 = vcvt.s32.f32 %v961
        %964 = vmin.xlane.f32.xlu0 %v963
        %v965 = vpop.xlane.xlu0 %964
        %vm966 = vcmp.eq.f32.partialorder %v963, %v965
        %v967 = vsel %vm966, %v962, inf
        %968 = vmin.xlane.f32.xlu0 %v967
        %v969 = vpop.xlane.xlu0 %968
        %v970 = vcvt.f32.s32 %v969
        %v971 = vcvt.f32.s32 %v965
        %v972 = vshll.u32 %v971, 16
        %v973 = vadd.s32 %v972, %v970
        %v974 = vsel %vm641, %v763, 2147483647
        %vm975 = vcmp.lt.s32.totalorder %v762, %v974
        %v976 = vsel %vm975, %v762, %v974
        %v977 = vand.u32 %v976, 65535
        %v978 = vshra.s32 %v976, 16
        %v979 = vcvt.s32.f32 %v977
        %v980 = vcvt.s32.f32 %v978
        %981 = vmin.xlane.f32.xlu0 %v980
        %v982 = vpop.xlane.xlu0 %981
        %vm983 = vcmp.eq.f32.partialorder %v980, %v982
        %v984 = vsel %vm983, %v979, inf
        %985 = vmin.xlane.f32.xlu0 %v984
        %v986 = vpop.xlane.xlu0 %985
        %v987 = vcvt.f32.s32 %v986
        %v988 = vcvt.f32.s32 %v982
        %v989 = vshll.u32 %v988, 16
        %v990 = vadd.s32 %v989, %v987
        %v991 = vsel %vm641, %v765, 2147483647
        %vm992 = vcmp.lt.s32.totalorder %v764, %v991
        %v993 = vsel %vm992, %v764, %v991
        %v994 = vand.u32 %v993, 65535
        %v995 = vshra.s32 %v993, 16
        %v996 = vcvt.s32.f32 %v994
        %v997 = vcvt.s32.f32 %v995
        %998 = vmin.xlane.f32.xlu0 %v997
        %v999 = vpop.xlane.xlu0 %998
        %vm1000 = vcmp.eq.f32.partialorder %v997, %v999
        %v1001 = vsel %vm1000, %v996, inf
        %1002 = vmin.xlane.f32.xlu0 %v1001
        %v1003 = vpop.xlane.xlu0 %1002
        %v1004 = vcvt.f32.s32 %v1003
        %v1005 = vcvt.f32.s32 %v999
        %v1006 = vshll.u32 %v1005, 16
        %v1007 = vadd.s32 %v1006, %v1004
        %v1008 = vsel %vm641, %v767, 2147483647
        %vm1009 = vcmp.lt.s32.totalorder %v766, %v1008
        %v1010 = vsel %vm1009, %v766, %v1008
        %v1011 = vand.u32 %v1010, 65535
        %v1012 = vshra.s32 %v1010, 16
        %v1013 = vcvt.s32.f32 %v1011
        %v1014 = vcvt.s32.f32 %v1012
        %1015 = vmin.xlane.f32.xlu0 %v1014
        %v1016 = vpop.xlane.xlu0 %1015
        %vm1017 = vcmp.eq.f32.partialorder %v1014, %v1016
        %v1018 = vsel %vm1017, %v1013, inf
        %1019 = vmin.xlane.f32.xlu0 %v1018
        %v1020 = vpop.xlane.xlu0 %1019
        %v1021 = vcvt.f32.s32 %v1020
        %v1022 = vcvt.f32.s32 %v1016
        %v1023 = vshll.u32 %v1022, 16
        %v1024 = vadd.s32 %v1023, %v1021
        %v1025 = vsel %vm641, %v769, 2147483647
        %vm1026 = vcmp.lt.s32.totalorder %v768, %v1025
        %v1027 = vsel %vm1026, %v768, %v1025
        %v1028 = vand.u32 %v1027, 65535
        %v1029 = vshra.s32 %v1027, 16
        %v1030 = vcvt.s32.f32 %v1028
        %v1031 = vcvt.s32.f32 %v1029
        %1032 = vmin.xlane.f32.xlu0 %v1031
        %v1033 = vpop.xlane.xlu0 %1032
        %vm1034 = vcmp.eq.f32.partialorder %v1031, %v1033
        %v1035 = vsel %vm1034, %v1030, inf
        %1036 = vmin.xlane.f32.xlu0 %v1035
        %v1037 = vpop.xlane.xlu0 %1036
        %v1038 = vcvt.f32.s32 %v1037
        %v1039 = vcvt.f32.s32 %v1033
        %v1040 = vshll.u32 %v1039, 16
        %v1041 = vadd.s32 %v1040, %v1038
        %vm1042 = vcmp.eq.s32.totalorder %v286, %v382
        %vm1043 = vcmp.eq.s32.totalorder %v640, %v382
        %vm1044 = vcmp.eq.s32.totalorder %v286, %v397
        %vm1045 = vcmp.eq.s32.totalorder %v640, %v397
        %vm1046 = vcmp.eq.s32.totalorder %v286, %v412
        %vm1047 = vcmp.eq.s32.totalorder %v640, %v412
        %vm1048 = vcmp.eq.s32.totalorder %v286, %v427
        %vm1049 = vcmp.eq.s32.totalorder %v640, %v427
        %vm1050 = vcmp.eq.s32.totalorder %v286, %v442
        %vm1051 = vcmp.eq.s32.totalorder %v640, %v442
        %vm1052 = vcmp.eq.s32.totalorder %v286, %v457
        %vm1053 = vcmp.eq.s32.totalorder %v640, %v457
        %vm1054 = vcmp.eq.s32.totalorder %v286, %v472
        %vm1055 = vcmp.eq.s32.totalorder %v640, %v472
        %vm1056 = vcmp.eq.s32.totalorder %v286, %v487
        %vm1057 = vcmp.eq.s32.totalorder %v640, %v487
        %vm1058 = vcmp.eq.s32.totalorder %v286, %v502
        %vm1059 = vcmp.eq.s32.totalorder %v640, %v502
        %vm1060 = vcmp.eq.s32.totalorder %v286, %v517
        %vm1061 = vcmp.eq.s32.totalorder %v640, %v517
        %vm1062 = vcmp.eq.s32.totalorder %v286, %v532
        %vm1063 = vcmp.eq.s32.totalorder %v640, %v532
        %vm1064 = vcmp.eq.s32.totalorder %v286, %v547
        %vm1065 = vcmp.eq.s32.totalorder %v640, %v547
        %vm1066 = vcmp.eq.s32.totalorder %v286, %v562
        %vm1067 = vcmp.eq.s32.totalorder %v640, %v562
        %vm1068 = vcmp.eq.s32.totalorder %v286, %v577
        %vm1069 = vcmp.eq.s32.totalorder %v640, %v577
        %vm1070 = vcmp.eq.s32.totalorder %v286, %v592
        %vm1071 = vcmp.eq.s32.totalorder %v640, %v592
        %vm1072 = vcmp.eq.s32.totalorder %v286, %v607
        %vm1073 = vcmp.eq.s32.totalorder %v640, %v607
        %v1074 = vadd.s32 %v786, 8
        %v1075 = vadd.s32 %v803, 8
        %v1076 = vadd.s32 %v820, 8
        %v1077 = vadd.s32 %v837, 8
        %v1078 = vadd.s32 %v854, 8
        %v1079 = vadd.s32 %v871, 8
        %v1080 = vadd.s32 %v888, 8
        %v1081 = vadd.s32 %v905, 8
        %v1082 = vadd.s32 %v922, 8
        %v1083 = vadd.s32 %v939, 8
        %v1084 = vadd.s32 %v956, 8
        %v1085 = vadd.s32 %v973, 8
        %v1086 = vadd.s32 %v990, 8
        %v1087 = vadd.s32 %v1007, 8
        %v1088 = vadd.s32 %v1024, 8
        %v1089 = vadd.s32 %v1041, 8
        %vm1090 = vcmp.eq.s32.totalorder %v286, %v1074
        %vm1091 = vcmp.eq.s32.totalorder %v640, %v1074
        %vm1092 = vcmp.eq.s32.totalorder %v286, %v1075
        %vm1093 = vcmp.eq.s32.totalorder %v640, %v1075
        %vm1094 = vcmp.eq.s32.totalorder %v286, %v1076
        %vm1095 = vcmp.eq.s32.totalorder %v640, %v1076
        %vm1096 = vcmp.eq.s32.totalorder %v286, %v1077
        %vm1097 = vcmp.eq.s32.totalorder %v640, %v1077
        %vm1098 = vcmp.eq.s32.totalorder %v286, %v1078
        %vm1099 = vcmp.eq.s32.totalorder %v640, %v1078
        %vm1100 = vcmp.eq.s32.totalorder %v286, %v1079
        %vm1101 = vcmp.eq.s32.totalorder %v640, %v1079
        %vm1102 = vcmp.eq.s32.totalorder %v286, %v1080
        %vm1103 = vcmp.eq.s32.totalorder %v640, %v1080
        %vm1104 = vcmp.eq.s32.totalorder %v286, %v1081
        %vm1105 = vcmp.eq.s32.totalorder %v640, %v1081
        %vm1106 = vcmp.eq.s32.totalorder %v286, %v1082
        %vm1107 = vcmp.eq.s32.totalorder %v640, %v1082
        %vm1108 = vcmp.eq.s32.totalorder %v286, %v1083
        %vm1109 = vcmp.eq.s32.totalorder %v640, %v1083
        %vm1110 = vcmp.eq.s32.totalorder %v286, %v1084
        %vm1111 = vcmp.eq.s32.totalorder %v640, %v1084
        %vm1112 = vcmp.eq.s32.totalorder %v286, %v1085
        %vm1113 = vcmp.eq.s32.totalorder %v640, %v1085
        %vm1114 = vcmp.eq.s32.totalorder %v286, %v1086
        %vm1115 = vcmp.eq.s32.totalorder %v640, %v1086
        %vm1116 = vcmp.eq.s32.totalorder %v286, %v1087
        %vm1117 = vcmp.eq.s32.totalorder %v640, %v1087
        %vm1118 = vcmp.eq.s32.totalorder %v286, %v1088
        %vm1119 = vcmp.eq.s32.totalorder %v640, %v1088
        %vm1120 = vcmp.eq.s32.totalorder %v286, %v1089
        %vm1121 = vcmp.eq.s32.totalorder %v640, %v1089
        %vm1122 = vmor %vm1042, %vm1090
        %vm1123 = vmor %vm1043, %vm1091
        %vm1124 = vmor %vm1044, %vm1092
        %vm1125 = vmor %vm1045, %vm1093
        %vm1126 = vmor %vm1046, %vm1094
        %vm1127 = vmor %vm1047, %vm1095
        %vm1128 = vmor %vm1048, %vm1096
        %vm1129 = vmor %vm1049, %vm1097
        %vm1130 = vmor %vm1050, %vm1098
        %vm1131 = vmor %vm1051, %vm1099
        %vm1132 = vmor %vm1052, %vm1100
        %vm1133 = vmor %vm1053, %vm1101
        %vm1134 = vmor %vm1054, %vm1102
        %vm1135 = vmor %vm1055, %vm1103
        %vm1136 = vmor %vm1056, %vm1104
        %vm1137 = vmor %vm1057, %vm1105
        %vm1138 = vmor %vm1058, %vm1106
        %vm1139 = vmor %vm1059, %vm1107
        %vm1140 = vmor %vm1060, %vm1108
        %vm1141 = vmor %vm1061, %vm1109
        %vm1142 = vmor %vm1062, %vm1110
        %vm1143 = vmor %vm1063, %vm1111
        %vm1144 = vmor %vm1064, %vm1112
        %vm1145 = vmor %vm1065, %vm1113
        %vm1146 = vmor %vm1066, %vm1114
        %vm1147 = vmor %vm1067, %vm1115
        %vm1148 = vmor %vm1068, %vm1116
        %vm1149 = vmor %vm1069, %vm1117
        %vm1150 = vmor %vm1070, %vm1118
        %vm1151 = vmor %vm1071, %vm1119
        %vm1152 = vmor %vm1072, %vm1120
        %vm1153 = vmor %vm1073, %vm1121
        %v1154 = vsel %vm1122, 1, 0
        %v1155 = vsel %vm1123, 1, 0
        %v1156 = vsel %vm1124, 1, 0
        %v1157 = vsel %vm1125, 1, 0
        %v1158 = vsel %vm1126, 1, 0
        %v1159 = vsel %vm1127, 1, 0
        %v1160 = vsel %vm1128, 1, 0
        %v1161 = vsel %vm1129, 1, 0
        %v1162 = vsel %vm1130, 1, 0
        %v1163 = vsel %vm1131, 1, 0
        %v1164 = vsel %vm1132, 1, 0
        %v1165 = vsel %vm1133, 1, 0
        %v1166 = vsel %vm1134, 1, 0
        %v1167 = vsel %vm1135, 1, 0
        %v1168 = vsel %vm1136, 1, 0
        %v1169 = vsel %vm1137, 1, 0
        %v1170 = vsel %vm1138, 1, 0
        %v1171 = vsel %vm1139, 1, 0
        %v1172 = vsel %vm1140, 1, 0
        %v1173 = vsel %vm1141, 1, 0
        %v1174 = vsel %vm1142, 1, 0
        %v1175 = vsel %vm1143, 1, 0
        %v1176 = vsel %vm1144, 1, 0
        %v1177 = vsel %vm1145, 1, 0
        %v1178 = vsel %vm1146, 1, 0
        %v1179 = vsel %vm1147, 1, 0
        %v1180 = vsel %vm1148, 1, 0
        %v1181 = vsel %vm1149, 1, 0
        %v1182 = vsel %vm1150, 1, 0
        %v1183 = vsel %vm1151, 1, 0
        %v1184 = vsel %vm1152, 1, 0
        %v1185 = vsel %vm1153, 1, 0
        %v1186 = vcvt.s32.f32 %v1154
        %v1187 = vcvt.s32.f32 %v1155
        %v1188 = vcvt.s32.f32 %v1156
        %v1189 = vcvt.s32.f32 %v1157
        %v1190 = vcvt.s32.f32 %v1158
        %v1191 = vcvt.s32.f32 %v1159
        %v1192 = vcvt.s32.f32 %v1160
        %v1193 = vcvt.s32.f32 %v1161
        %v1194 = vcvt.s32.f32 %v1162
        %v1195 = vcvt.s32.f32 %v1163
        %v1196 = vcvt.s32.f32 %v1164
        %v1197 = vcvt.s32.f32 %v1165
        %v1198 = vcvt.s32.f32 %v1166
        %v1199 = vcvt.s32.f32 %v1167
        %v1200 = vcvt.s32.f32 %v1168
        %v1201 = vcvt.s32.f32 %v1169
        %v1202 = vcvt.s32.f32 %v1170
        %v1203 = vcvt.s32.f32 %v1171
        %v1204 = vcvt.s32.f32 %v1172
        %v1205 = vcvt.s32.f32 %v1173
        %v1206 = vcvt.s32.f32 %v1174
        %v1207 = vcvt.s32.f32 %v1175
        %v1208 = vcvt.s32.f32 %v1176
        %v1209 = vcvt.s32.f32 %v1177
        %v1210 = vcvt.s32.f32 %v1178
        %v1211 = vcvt.s32.f32 %v1179
        %v1212 = vcvt.s32.f32 %v1180
        %v1213 = vcvt.s32.f32 %v1181
        %v1214 = vcvt.s32.f32 %v1182
        %v1215 = vcvt.s32.f32 %v1183
        %v1216 = vcvt.s32.f32 %v1184
        %v1217 = vcvt.s32.f32 %v1185
        %v1218 = vld [vmem:[%s2] sm:$0xff]
        %v1219 = vld [vmem:[%s2 + $0x8] sm:$0xff]
        %v1220 = vld [vmem:[%s2 + $0x10] sm:$0xff]
        %v1221 = vld [vmem:[%s2 + $0x18] sm:$0xff]
        %v1222 = vld [vmem:[%s2 + $0x20] sm:$0xff]
        %v1223 = vld [vmem:[%s2 + $0x28] sm:$0xff]
        %v1224 = vld [vmem:[%s2 + $0x30] sm:$0xff]
        %v1225 = vld [vmem:[%s2 + $0x38] sm:$0xff]
        %v1226 = vld [vmem:[%s2 + $0x40] sm:$0xff]
        %v1227 = vld [vmem:[%s2 + $0x48] sm:$0xff]
        %v1228 = vld [vmem:[%s2 + $0x50] sm:$0xff]
        %v1229 = vld [vmem:[%s2 + $0x58] sm:$0xff]
        %v1230 = vld [vmem:[%s2 + $0x60] sm:$0xff]
        %v1231 = vld [vmem:[%s2 + $0x68] sm:$0xff]
        %v1232 = vld [vmem:[%s2 + $0x70] sm:$0xff]
        %v1233 = vld [vmem:[%s2 + $0x78] sm:$0xff]
        %v1234 = vld [vmem:[%s2 + $0x80] sm:$0xff]
        %v1235 = vld [vmem:[%s2 + $0x88] sm:$0xff]
        %v1236 = vld [vmem:[%s2 + $0x90] sm:$0xff]
        %v1237 = vld [vmem:[%s2 + $0x98] sm:$0x3]
        %vm1238 = vcmask 211968
        %v1240 = vsel %vm1238, %v1187, 0
        %v1243 = vsel %vm1238, %v1189, 0
        %v1246 = vsel %vm1238, %v1191, 0
        %v1249 = vsel %vm1238, %v1193, 0
        %v1252 = vsel %vm1238, %v1195, 0
        %v1255 = vsel %vm1238, %v1197, 0
        %v1258 = vsel %vm1238, %v1199, 0
        %v1261 = vsel %vm1238, %v1201, 0
        %v1264 = vsel %vm1238, %v1203, 0
        %v1267 = vsel %vm1238, %v1205, 0
        %v1270 = vsel %vm1238, %v1207, 0
        %v1273 = vsel %vm1238, %v1209, 0
        %v1276 = vsel %vm1238, %v1211, 0
        %v1279 = vsel %vm1238, %v1213, 0
        %v1282 = vsel %vm1238, %v1215, 0
        %v1285 = vsel %vm1238, %v1217, 0
        %vm1287 = vcmask 1041408
        %v1289 = vsel %vm1287, %v1237, 0
        %1291 = vmatpush.msra.mxu0 %v1233
        %1292 = vmatpush.msra.mxu0 %v1232
        %1293 = vmatpush.msra.mxu0 %v1231
        %1294 = vmatpush.msra.mxu0 %v1230
        %1295 = vmatpush.msra.mxu0 %v1229
        %1296 = vmatpush.msra.mxu0 %v1228
        %1297 = vmatpush.msra.mxu0 %v1227
        %1298 = vmatpush.msra.mxu0 %v1226
        %1299 = vmatpush.msra.mxu0 %v1225
        %1300 = vmatpush.msra.mxu0 %v1224
        %1301 = vmatpush.msra.mxu0 %v1223
        %1302 = vmatpush.msra.mxu0 %v1222
        %1303 = vmatpush.msra.mxu0 %v1221
        %1304 = vmatpush.msra.mxu0 %v1220
        %1305 = vmatpush.msra.mxu0 %v1219
        %1306 = vmatpush.msra.mxu0 %v1218
        %1307 = vmatmul.f32.gmra.mxu0 %v1186
        %v1308 = vpop.f32.mrf.mxu0
        %v1309 = vadd.f32 0.0, %v1308
        %1310 = vmatmul.f32.gmra.mxu0 %v1188
        %v1311 = vpop.f32.mrf.mxu0
        %v1312 = vadd.f32 0.0, %v1311
        %1313 = vmatmul.f32.gmra.mxu0 %v1190
        %v1314 = vpop.f32.mrf.mxu0
        %v1315 = vadd.f32 0.0, %v1314
        %1316 = vmatmul.f32.gmra.mxu0 %v1192
        %v1317 = vpop.f32.mrf.mxu0
        %v1318 = vadd.f32 0.0, %v1317
        %1319 = vmatmul.f32.gmra.mxu0 %v1194
        %v1320 = vpop.f32.mrf.mxu0
        %v1321 = vadd.f32 0.0, %v1320
        %1322 = vmatmul.f32.gmra.mxu0 %v1196
        %v1323 = vpop.f32.mrf.mxu0
        %v1324 = vadd.f32 0.0, %v1323
        %1325 = vmatmul.f32.gmra.mxu0 %v1198
        %v1326 = vpop.f32.mrf.mxu0
        %v1327 = vadd.f32 0.0, %v1326
        %1328 = vmatmul.f32.gmra.mxu0 %v1200
        %v1329 = vpop.f32.mrf.mxu0
        %v1330 = vadd.f32 0.0, %v1329
        %1331 = vmatmul.f32.gmra.mxu0 %v1202
        %v1332 = vpop.f32.mrf.mxu0
        %v1333 = vadd.f32 0.0, %v1332
        %1334 = vmatmul.f32.gmra.mxu0 %v1204
        %v1335 = vpop.f32.mrf.mxu0
        %v1336 = vadd.f32 0.0, %v1335
        %1337 = vmatmul.f32.gmra.mxu0 %v1206
        %v1338 = vpop.f32.mrf.mxu0
        %v1339 = vadd.f32 0.0, %v1338
        %1340 = vmatmul.f32.gmra.mxu0 %v1208
        %v1341 = vpop.f32.mrf.mxu0
        %v1342 = vadd.f32 0.0, %v1341
        %1343 = vmatmul.f32.gmra.mxu0 %v1210
        %v1344 = vpop.f32.mrf.mxu0
        %v1345 = vadd.f32 0.0, %v1344
        %1346 = vmatmul.f32.gmra.mxu0 %v1212
        %v1347 = vpop.f32.mrf.mxu0
        %v1348 = vadd.f32 0.0, %v1347
        %1349 = vmatmul.f32.gmra.mxu0 %v1214
        %v1350 = vpop.f32.mrf.mxu0
        %v1351 = vadd.f32 0.0, %v1350
        %1352 = vmatmul.f32.gmra.mxu0 %v1216
        %v1353 = vpop.f32.mrf.mxu0
        %v1354 = vadd.f32 0.0, %v1353
        %1355 = vdwg.mxu0
        %1356 = vmatpush.msra.mxu0 0.0
        %1357 = vmatpush.msra.mxu0 0.0
        %1358 = vmatpush.msra.mxu0 0.0
        %1359 = vmatpush.msra.mxu0 0.0
        %1360 = vmatpush.msra.mxu0 0.0
        %1361 = vmatpush.msra.mxu0 0.0
        %1362 = vmatpush.msra.mxu0 0.0
        %1363 = vmatpush.msra.mxu0 0.0
        %1364 = vmatpush.msra.mxu0 0.0
        %1365 = vmatpush.msra.mxu0 0.0
        %1366 = vmatpush.msra.mxu0 0.0
        %1367 = vmatpush.msra.mxu0 0.0
        %1368 = vmatpush.msra.mxu0 %v1289
        %1369 = vmatpush.msra.mxu0 %v1236
        %1370 = vmatpush.msra.mxu0 %v1235
        %1371 = vmatpush.msra.mxu0 %v1234
        %1372 = vmatmul.f32.gmra.mxu0 %v1240
        %v1373 = vpop.f32.mrf.mxu0
        %v1374 = vadd.f32 %v1309, %v1373
        %1375 = vmatmul.f32.gmra.mxu0 %v1243
        %v1376 = vpop.f32.mrf.mxu0
        %v1377 = vadd.f32 %v1312, %v1376
        %1378 = vmatmul.f32.gmra.mxu0 %v1246
        %v1379 = vpop.f32.mrf.mxu0
        %v1380 = vadd.f32 %v1315, %v1379
        %1381 = vmatmul.f32.gmra.mxu0 %v1249
        %v1382 = vpop.f32.mrf.mxu0
        %v1383 = vadd.f32 %v1318, %v1382
        %1384 = vmatmul.f32.gmra.mxu0 %v1252
        %v1385 = vpop.f32.mrf.mxu0
        %v1386 = vadd.f32 %v1321, %v1385
        %1387 = vmatmul.f32.gmra.mxu0 %v1255
        %v1388 = vpop.f32.mrf.mxu0
        %v1389 = vadd.f32 %v1324, %v1388
        %1390 = vmatmul.f32.gmra.mxu0 %v1258
        %v1391 = vpop.f32.mrf.mxu0
        %v1392 = vadd.f32 %v1327, %v1391
        %1393 = vmatmul.f32.gmra.mxu0 %v1261
        %v1394 = vpop.f32.mrf.mxu0
        %v1395 = vadd.f32 %v1330, %v1394
        %1396 = vmatmul.f32.gmra.mxu0 %v1264
        %v1397 = vpop.f32.mrf.mxu0
        %v1398 = vadd.f32 %v1333, %v1397
        %1399 = vmatmul.f32.gmra.mxu0 %v1267
        %v1400 = vpop.f32.mrf.mxu0
        %v1401 = vadd.f32 %v1336, %v1400
        %1402 = vmatmul.f32.gmra.mxu0 %v1270
        %v1403 = vpop.f32.mrf.mxu0
        %v1404 = vadd.f32 %v1339, %v1403
        %1405 = vmatmul.f32.gmra.mxu0 %v1273
        %v1406 = vpop.f32.mrf.mxu0
        %v1407 = vadd.f32 %v1342, %v1406
        %1408 = vmatmul.f32.gmra.mxu0 %v1276
        %v1409 = vpop.f32.mrf.mxu0
        %v1410 = vadd.f32 %v1345, %v1409
        %1411 = vmatmul.f32.gmra.mxu0 %v1279
        %v1412 = vpop.f32.mrf.mxu0
        %v1413 = vadd.f32 %v1348, %v1412
        %1414 = vmatmul.f32.gmra.mxu0 %v1282
        %v1415 = vpop.f32.mrf.mxu0
        %v1416 = vadd.f32 %v1351, %v1415
        %1417 = vmatmul.f32.gmra.mxu0 %v1285
        %v1418 = vpop.f32.mrf.mxu0
        %v1419 = vadd.f32 %v1354, %v1418
        %1420 = vdwg.mxu0
        %v1421 = vmax.f32 %v1374, 0.0
        %v1422 = vmax.f32 %v1377, 0.0
        %v1423 = vmax.f32 %v1380, 0.0
        %v1424 = vmax.f32 %v1383, 0.0
        %v1425 = vmax.f32 %v1386, 0.0
        %v1426 = vmax.f32 %v1389, 0.0
        %v1427 = vmax.f32 %v1392, 0.0
        %v1428 = vmax.f32 %v1395, 0.0
        %v1429 = vmax.f32 %v1398, 0.0
        %v1430 = vmax.f32 %v1401, 0.0
        %v1431 = vmax.f32 %v1404, 0.0
        %v1432 = vmax.f32 %v1407, 0.0
        %v1433 = vmax.f32 %v1410, 0.0
        %v1434 = vmax.f32 %v1413, 0.0
        %v1435 = vmax.f32 %v1416, 0.0
        %v1436 = vmax.f32 %v1419, 0.0
        %v1437 = vld [vmem:[%s3] sm:$0xff]
        %v1438 = vld [vmem:[%s3 + $0x8] sm:$0xff]
        %v1439 = vld [vmem:[%s3 + $0x10] sm:$0xff]
        %v1440 = vld [vmem:[%s3 + $0x18] sm:$0xff]
        %v1441 = vld [vmem:[%s3 + $0x20] sm:$0x1]
        %v1442 = vperm.slane %v1441, 0
        %vm1443 = vcmask 261120
        %v1445 = vsel %vm1443, %v1421, 0
        %v1448 = vsel %vm1443, %v1422, 0
        %v1451 = vsel %vm1443, %v1423, 0
        %v1454 = vsel %vm1443, %v1424, 0
        %v1457 = vsel %vm1443, %v1425, 0
        %v1460 = vsel %vm1443, %v1426, 0
        %v1463 = vsel %vm1443, %v1427, 0
        %v1466 = vsel %vm1443, %v1428, 0
        %v1469 = vsel %vm1443, %v1429, 0
        %v1472 = vsel %vm1443, %v1430, 0
        %v1475 = vsel %vm1443, %v1431, 0
        %v1478 = vsel %vm1443, %v1432, 0
        %v1481 = vsel %vm1443, %v1433, 0
        %v1484 = vsel %vm1443, %v1434, 0
        %v1487 = vsel %vm1443, %v1435, 0
        %v1490 = vsel %vm1443, %v1436, 0
        %1492 = vmatpush.msra.mxu0 0.0
        %1493 = vmatpush.msra.mxu0 0.0
        %1494 = vmatpush.msra.mxu0 0.0
        %1495 = vmatpush.msra.mxu0 0.0
        %1496 = vmatpush.msra.mxu0 0.0
        %1497 = vmatpush.msra.mxu0 0.0
        %1498 = vmatpush.msra.mxu0 0.0
        %1499 = vmatpush.msra.mxu0 0.0
        %1500 = vmatpush.msra.mxu0 0.0
        %1501 = vmatpush.msra.mxu0 0.0
        %1502 = vmatpush.msra.mxu0 0.0
        %1503 = vmatpush.msra.mxu0 0.0
        %1504 = vmatpush.msra.mxu0 %v1440
        %1505 = vmatpush.msra.mxu0 %v1439
        %1506 = vmatpush.msra.mxu0 %v1438
        %1507 = vmatpush.msra.mxu0 %v1437
        %1508 = vmatmul.f32.gmra.mxu0 %v1445
        %v1509 = vpop.f32.mrf.mxu0
        %v1510 = vadd.f32 %v1442, %v1509
        %1511 = vmatmul.f32.gmra.mxu0 %v1448
        %v1512 = vpop.f32.mrf.mxu0
        %v1513 = vadd.f32 %v1442, %v1512
        %1514 = vmatmul.f32.gmra.mxu0 %v1451
        %v1515 = vpop.f32.mrf.mxu0
        %v1516 = vadd.f32 %v1442, %v1515
        %1517 = vmatmul.f32.gmra.mxu0 %v1454
        %v1518 = vpop.f32.mrf.mxu0
        %v1519 = vadd.f32 %v1442, %v1518
        %1520 = vmatmul.f32.gmra.mxu0 %v1457
        %v1521 = vpop.f32.mrf.mxu0
        %v1522 = vadd.f32 %v1442, %v1521
        %1523 = vmatmul.f32.gmra.mxu0 %v1460
        %v1524 = vpop.f32.mrf.mxu0
        %v1525 = vadd.f32 %v1442, %v1524
        %1526 = vmatmul.f32.gmra.mxu0 %v1463
        %v1527 = vpop.f32.mrf.mxu0
        %v1528 = vadd.f32 %v1442, %v1527
        %1529 = vmatmul.f32.gmra.mxu0 %v1466
        %v1530 = vpop.f32.mrf.mxu0
        %v1531 = vadd.f32 %v1442, %v1530
        %1532 = vmatmul.f32.gmra.mxu0 %v1469
        %v1533 = vpop.f32.mrf.mxu0
        %v1534 = vadd.f32 %v1442, %v1533
        %1535 = vmatmul.f32.gmra.mxu0 %v1472
        %v1536 = vpop.f32.mrf.mxu0
        %v1537 = vadd.f32 %v1442, %v1536
        %1538 = vmatmul.f32.gmra.mxu0 %v1475
        %v1539 = vpop.f32.mrf.mxu0
        %v1540 = vadd.f32 %v1442, %v1539
        %1541 = vmatmul.f32.gmra.mxu0 %v1478
        %v1542 = vpop.f32.mrf.mxu0
        %v1543 = vadd.f32 %v1442, %v1542
        %1544 = vmatmul.f32.gmra.mxu0 %v1481
        %v1545 = vpop.f32.mrf.mxu0
        %v1546 = vadd.f32 %v1442, %v1545
        %1547 = vmatmul.f32.gmra.mxu0 %v1484
        %v1548 = vpop.f32.mrf.mxu0
        %v1549 = vadd.f32 %v1442, %v1548
        %1550 = vmatmul.f32.gmra.mxu0 %v1487
        %v1551 = vpop.f32.mrf.mxu0
        %v1552 = vadd.f32 %v1442, %v1551
        %1553 = vmatmul.f32.gmra.mxu0 %v1490
        %v1554 = vpop.f32.mrf.mxu0
        %v1555 = vadd.f32 %v1442, %v1554
        %1556 = vdwg.mxu0
        %vm1557 = vcmask 130048
        %1558 = vst.msk [vmem:[%s232] sm:$0xff] %vm1557, %v1510
        %1559 = vst.msk [vmem:[%s232 + $0x8] sm:$0xff] %vm1557, %v1513
        %1560 = vst.msk [vmem:[%s232 + $0x10] sm:$0xff] %vm1557, %v1516
        %1561 = vst.msk [vmem:[%s232 + $0x18] sm:$0xff] %vm1557, %v1519
        %1562 = vst.msk [vmem:[%s232 + $0x20] sm:$0xff] %vm1557, %v1522
        %1563 = vst.msk [vmem:[%s232 + $0x28] sm:$0xff] %vm1557, %v1525
        %1564 = vst.msk [vmem:[%s232 + $0x30] sm:$0xff] %vm1557, %v1528
        %1565 = vst.msk [vmem:[%s232 + $0x38] sm:$0xff] %vm1557, %v1531
        %1566 = vst.msk [vmem:[%s232 + $0x40] sm:$0xff] %vm1557, %v1534
        %1567 = vst.msk [vmem:[%s232 + $0x48] sm:$0xff] %vm1557, %v1537
        %1568 = vst.msk [vmem:[%s232 + $0x50] sm:$0xff] %vm1557, %v1540
        %1569 = vst.msk [vmem:[%s232 + $0x58] sm:$0xff] %vm1557, %v1543
        %1570 = vst.msk [vmem:[%s232 + $0x60] sm:$0xff] %vm1557, %v1546
        %1571 = vst.msk [vmem:[%s232 + $0x68] sm:$0xff] %vm1557, %v1549
        %1572 = vst.msk [vmem:[%s232 + $0x70] sm:$0xff] %vm1557, %v1552
        %1573 = vst.msk [vmem:[%s232 + $0x78] sm:$0xff] %vm1557, %v1555
        %s1574 = sand.u32 %s117, 1
        %s1575 = sand.u32 %s117, 1
        %s1576 = smul.addr %s1575, 128
        %s1577 = scalar_lea.vmem [#allocation2], %s1576
        // Predicated region
        $region37: #{tpu_custom_call.1} parent=35 // pred_check
          %p1578 = pneg %p127
        $region38: #{tpu_custom_call.1} parent=35 // pred_check_branch
          %1580 = sbr.rel (%p1578) target = $region40
        $region39: #{tpu_custom_call.1} parent=35 // pred_region
          %s1581 = smul.u32 16, %s15
          %s1582 = ssub.s32 38, %s1581
          %p1583 = scmp.lt.s32.totalorder %s1582, 16
          %s1584 = scalar_select %p1583, %s1582, 16
          %s1585 = smul.u32 8, %s1584
          %p1586 = scmp.ne.s32.totalorder 0, %s1585
          %s1587 = smul.addr %s1581, 8
          %s1588 = scalar_lea.vmem %s4, %s1587
          // Predicated region
          $region41: #{tpu_custom_call.1} parent=39 // pred_check
            %p1589 = pneg %p1586
          $region42: #{tpu_custom_call.1} parent=39 // pred_check_branch
            %1591 = sbr.rel (%p1589) target = $region44
          $region43: #{tpu_custom_call.1} parent=39 // pred_region
            // Predicated region
            $region45: #{tpu_custom_call.1} parent=43 // pred_check
              _
            $region46: #{tpu_custom_call.1} parent=43 // pred_check_branch
              %1593 = sbr.rel (0) target = $region48
            $region47: #{tpu_custom_call.1} parent=43 // pred_region
              // Predicated region
              $region67: #{tpu_custom_call.1} parent=47 // pred_check
                _
              $region68: #{tpu_custom_call.1} parent=47 // pred_check_branch
                %1673 = sbr.rel (0) target = $region70
              $region69: #{tpu_custom_call.1} parent=47 // pred_region
                %s1674 = sshrl.u32 %s1584, 4
                // While loop
                $region71: #{tpu_custom_call.1} parent=69 // loop_pre_header
                  _
                $region72: #{tpu_custom_call.1} parent=69 // loop_header
                  %s1676 = sphi 0, %s1678
                  %p1677 = scmp.ge.s32.totalorder %s1676, %s1674
                  %s1681 = sphi 0, %s1718
                  %s1682 = sphi %s1577, %s1721
                  %s1683 = sphi %s1588, %s1722
                $region73: #{tpu_custom_call.1} parent=69 // loop_header_branch
                  %1680 = sbr.rel (%p1677) target = $region77
                $region74: #{tpu_custom_call.1} parent=69 // loop_body
                  %v1684 = vld [vmem:[%s1682] sm:$0xff]
                  %1685 = vst [vmem:[%s1683] sm:$0xff] %v1684
                  %v1686 = vld [vmem:[%s1682 + $0x8] sm:$0xff]
                  %1687 = vst [vmem:[%s1683 + $0x8] sm:$0xff] %v1686
                  %v1688 = vld [vmem:[%s1682 + $0x10] sm:$0xff]
                  %1689 = vst [vmem:[%s1683 + $0x10] sm:$0xff] %v1688
                  %v1690 = vld [vmem:[%s1682 + $0x18] sm:$0xff]
                  %1691 = vst [vmem:[%s1683 + $0x18] sm:$0xff] %v1690
                  %v1692 = vld [vmem:[%s1682 + $0x20] sm:$0xff]
                  %1693 = vst [vmem:[%s1683 + $0x20] sm:$0xff] %v1692
                  %v1694 = vld [vmem:[%s1682 + $0x28] sm:$0xff]
                  %1695 = vst [vmem:[%s1683 + $0x28] sm:$0xff] %v1694
                  %v1696 = vld [vmem:[%s1682 + $0x30] sm:$0xff]
                  %1697 = vst [vmem:[%s1683 + $0x30] sm:$0xff] %v1696
                  %v1698 = vld [vmem:[%s1682 + $0x38] sm:$0xff]
                  %1699 = vst [vmem:[%s1683 + $0x38] sm:$0xff] %v1698
                  %v1700 = vld [vmem:[%s1682 + $0x40] sm:$0xff]
                  %1701 = vst [vmem:[%s1683 + $0x40] sm:$0xff] %v1700
                  %v1702 = vld [vmem:[%s1682 + $0x48] sm:$0xff]
                  %1703 = vst [vmem:[%s1683 + $0x48] sm:$0xff] %v1702
                  %v1704 = vld [vmem:[%s1682 + $0x50] sm:$0xff]
                  %1705 = vst [vmem:[%s1683 + $0x50] sm:$0xff] %v1704
                  %v1706 = vld [vmem:[%s1682 + $0x58] sm:$0xff]
                  %1707 = vst [vmem:[%s1683 + $0x58] sm:$0xff] %v1706
                  %v1708 = vld [vmem:[%s1682 + $0x60] sm:$0xff]
                  %1709 = vst [vmem:[%s1683 + $0x60] sm:$0xff] %v1708
                  %v1710 = vld [vmem:[%s1682 + $0x68] sm:$0xff]
                  %1711 = vst [vmem:[%s1683 + $0x68] sm:$0xff] %v1710
                  %v1712 = vld [vmem:[%s1682 + $0x70] sm:$0xff]
                  %1713 = vst [vmem:[%s1683 + $0x70] sm:$0xff] %v1712
                  %v1714 = vld [vmem:[%s1682 + $0x78] sm:$0xff]
                  %1715 = vst [vmem:[%s1683 + $0x78] sm:$0xff] %v1714
                  %s1716 = sadd.s32 1, %s1681
                  %p1717 = scmp.ge.s32.totalorder %s1716, %s1674
                  %s1718 = scalar_select %p1717, 0, %s1716
                  %s1719 = smul.u32 %s1718, 128
                  %s1720 = smul.u32 %s1718, 128
                  %s1721 = scalar_lea.vmem %s1577, %s1719 [#allocation2]
                  %s1722 = scalar_lea.vmem %s1588, %s1720
                $region75: #{tpu_custom_call.1} parent=69 // loop_footer
                  %s1678 = sadd.s32 %s1676, 1
                $region76: #{tpu_custom_call.1} parent=69 // loop_footer_branch
                  %1675 = sbr.rel target = $region72
                $region77: #{tpu_custom_call.1} parent=69 // loop_exit
                  _
                %s1723 = sshrl.u32 %s1584, 4
                %s1724 = sand.u32 %s1584, 15
                %s1725 = smul.u32 %s1723, 16
                %s1726 = smul.u32 8, %s1725
                %s1727 = scalar_lea.vmem %s1577, %s1726 [#allocation2]
                %s1728 = smul.u32 8, %s1725
                %s1729 = scalar_lea.vmem %s1588, %s1728
                // While loop
                $region78: #{tpu_custom_call.1} parent=69 // loop_pre_header
                  _
                $region79: #{tpu_custom_call.1} parent=69 // loop_header
                  %s1731 = sphi 0, %s1733
                  %p1732 = scmp.ge.s32.totalorder %s1731, %s1724
                  %s1736 = sphi 0, %s1743
                  %s1737 = sphi %s1727, %s1746
                  %s1738 = sphi %s1729, %s1747
                $region80: #{tpu_custom_call.1} parent=69 // loop_header_branch
                  %1735 = sbr.rel (%p1732) target = $region84
                $region81: #{tpu_custom_call.1} parent=69 // loop_body
                  %v1739 = vld [vmem:[%s1737] sm:$0xff]
                  %1740 = vst [vmem:[%s1738] sm:$0xff] %v1739
                  %s1741 = sadd.s32 1, %s1736
                  %p1742 = scmp.ge.s32.totalorder %s1741, %s1724
                  %s1743 = scalar_select %p1742, 0, %s1741
                  %s1744 = smul.u32 %s1743, 8
                  %s1745 = smul.u32 %s1743, 8
                  %s1746 = scalar_lea.vmem %s1727, %s1744 [#allocation2]
                  %s1747 = scalar_lea.vmem %s1729, %s1745
                $region82: #{tpu_custom_call.1} parent=69 // loop_footer
                  %s1733 = sadd.s32 %s1731, 1
                $region83: #{tpu_custom_call.1} parent=69 // loop_footer_branch
                  %1730 = sbr.rel target = $region79
                $region84: #{tpu_custom_call.1} parent=69 // loop_exit
                  _
              $region70: #{tpu_custom_call.1} parent=47 // pred_fallthru
                _
              // Predicated region
              $region85: #{tpu_custom_call.1} parent=47 // pred_check
                _
              $region86: #{tpu_custom_call.1} parent=47 // pred_check_branch
                %1749 = sbr.rel target = $region88
              $region87: #{tpu_custom_call.1} parent=47 // pred_region
                _
              $region88: #{tpu_custom_call.1} parent=47 // pred_fallthru
                _
            $region48: #{tpu_custom_call.1} parent=43 // pred_fallthru
              _
            // Predicated region
            $region49: #{tpu_custom_call.1} parent=43 // pred_check
              _
            $region50: #{tpu_custom_call.1} parent=43 // pred_check_branch
              %1595 = sbr.rel target = $region52
            $region51: #{tpu_custom_call.1} parent=43 // pred_region
              %s1597 = ssub.s32 256, 1
              %s1598 = sshrl.u32 %s1584, 4
              // While loop
              $region53: #{tpu_custom_call.1} parent=51 // loop_pre_header
                _
              $region54: #{tpu_custom_call.1} parent=51 // loop_header
                %s1600 = sphi 0, %s1602
                %p1601 = scmp.ge.s32.totalorder %s1600, %s1598
                %s1605 = sphi 0, %s1642
                %s1606 = sphi %s1577, %s1645
                %s1607 = sphi %s1588, %s1646
              $region55: #{tpu_custom_call.1} parent=51 // loop_header_branch
                %1604 = sbr.rel (%p1601) target = $region59
              $region56: #{tpu_custom_call.1} parent=51 // loop_body
                %v1608 = vld [vmem:[%s1606] sm:%s1597]
                %1609 = vst [vmem:[%s1607] sm:%s1597] %v1608
                %v1610 = vld [vmem:[%s1606 + $0x8] sm:%s1597]
                %1611 = vst [vmem:[%s1607 + $0x8] sm:%s1597] %v1610
                %v1612 = vld [vmem:[%s1606 + $0x10] sm:%s1597]
                %1613 = vst [vmem:[%s1607 + $0x10] sm:%s1597] %v1612
                %v1614 = vld [vmem:[%s1606 + $0x18] sm:%s1597]
                %1615 = vst [vmem:[%s1607 + $0x18] sm:%s1597] %v1614
                %v1616 = vld [vmem:[%s1606 + $0x20] sm:%s1597]
                %1617 = vst [vmem:[%s1607 + $0x20] sm:%s1597] %v1616
                %v1618 = vld [vmem:[%s1606 + $0x28] sm:%s1597]
                %1619 = vst [vmem:[%s1607 + $0x28] sm:%s1597] %v1618
                %v1620 = vld [vmem:[%s1606 + $0x30] sm:%s1597]
                %1621 = vst [vmem:[%s1607 + $0x30] sm:%s1597] %v1620
                %v1622 = vld [vmem:[%s1606 + $0x38] sm:%s1597]
                %1623 = vst [vmem:[%s1607 + $0x38] sm:%s1597] %v1622
                %v1624 = vld [vmem:[%s1606 + $0x40] sm:%s1597]
                %1625 = vst [vmem:[%s1607 + $0x40] sm:%s1597] %v1624
                %v1626 = vld [vmem:[%s1606 + $0x48] sm:%s1597]
                %1627 = vst [vmem:[%s1607 + $0x48] sm:%s1597] %v1626
                %v1628 = vld [vmem:[%s1606 + $0x50] sm:%s1597]
                %1629 = vst [vmem:[%s1607 + $0x50] sm:%s1597] %v1628
                %v1630 = vld [vmem:[%s1606 + $0x58] sm:%s1597]
                %1631 = vst [vmem:[%s1607 + $0x58] sm:%s1597] %v1630
                %v1632 = vld [vmem:[%s1606 + $0x60] sm:%s1597]
                %1633 = vst [vmem:[%s1607 + $0x60] sm:%s1597] %v1632
                %v1634 = vld [vmem:[%s1606 + $0x68] sm:%s1597]
                %1635 = vst [vmem:[%s1607 + $0x68] sm:%s1597] %v1634
                %v1636 = vld [vmem:[%s1606 + $0x70] sm:%s1597]
                %1637 = vst [vmem:[%s1607 + $0x70] sm:%s1597] %v1636
                %v1638 = vld [vmem:[%s1606 + $0x78] sm:%s1597]
                %1639 = vst [vmem:[%s1607 + $0x78] sm:%s1597] %v1638
                %s1640 = sadd.s32 1, %s1605
                %p1641 = scmp.ge.s32.totalorder %s1640, %s1598
                %s1642 = scalar_select %p1641, 0, %s1640
                %s1643 = smul.u32 %s1642, 128
                %s1644 = smul.u32 %s1642, 128
                %s1645 = scalar_lea.vmem %s1577, %s1643 [#allocation2]
                %s1646 = scalar_lea.vmem %s1588, %s1644
              $region57: #{tpu_custom_call.1} parent=51 // loop_footer
                %s1602 = sadd.s32 %s1600, 1
              $region58: #{tpu_custom_call.1} parent=51 // loop_footer_branch
                %1599 = sbr.rel target = $region54
              $region59: #{tpu_custom_call.1} parent=51 // loop_exit
                _
              %s1647 = sshrl.u32 %s1584, 4
              %s1648 = sand.u32 %s1584, 15
              %s1649 = smul.u32 %s1647, 16
              %s1650 = smul.u32 8, %s1649
              %s1651 = scalar_lea.vmem %s1577, %s1650 [#allocation2]
              %s1652 = smul.u32 8, %s1649
              %s1653 = scalar_lea.vmem %s1588, %s1652
              // While loop
              $region60: #{tpu_custom_call.1} parent=51 // loop_pre_header
                _
              $region61: #{tpu_custom_call.1} parent=51 // loop_header
                %s1655 = sphi 0, %s1657
                %p1656 = scmp.ge.s32.totalorder %s1655, %s1648
                %s1660 = sphi 0, %s1667
                %s1661 = sphi %s1651, %s1670
                %s1662 = sphi %s1653, %s1671
              $region62: #{tpu_custom_call.1} parent=51 // loop_header_branch
                %1659 = sbr.rel (%p1656) target = $region66
              $region63: #{tpu_custom_call.1} parent=51 // loop_body
                %v1663 = vld [vmem:[%s1661] sm:%s1597]
                %1664 = vst [vmem:[%s1662] sm:%s1597] %v1663
                %s1665 = sadd.s32 1, %s1660
                %p1666 = scmp.ge.s32.totalorder %s1665, %s1648
                %s1667 = scalar_select %p1666, 0, %s1665
                %s1668 = smul.u32 %s1667, 8
                %s1669 = smul.u32 %s1667, 8
                %s1670 = scalar_lea.vmem %s1651, %s1668 [#allocation2]
                %s1671 = scalar_lea.vmem %s1653, %s1669
              $region64: #{tpu_custom_call.1} parent=51 // loop_footer
                %s1657 = sadd.s32 %s1655, 1
              $region65: #{tpu_custom_call.1} parent=51 // loop_footer_branch
                %1654 = sbr.rel target = $region61
              $region66: #{tpu_custom_call.1} parent=51 // loop_exit
                _
            $region52: #{tpu_custom_call.1} parent=43 // pred_fallthru
              _
          $region44: #{tpu_custom_call.1} parent=39 // pred_fallthru
            _
          %1750 = vnop
        $region40: #{tpu_custom_call.1} parent=35 // pred_fallthru
          _
      $region36: #{tpu_custom_call.1} parent=5 // pred_fallthru
        _
      %p1751 = scmp.le.s32.totalorder 2, %s10
      // Predicated region
      $region89: #{tpu_custom_call.1} parent=5 // pred_check
        %p1752 = pneg %p1751
      $region90: #{tpu_custom_call.1} parent=5 // pred_check_branch
        %1754 = sbr.rel (%p1752) target = $region92
      $region91: #{tpu_custom_call.1} parent=5 // pred_region
        %s1755 = ssub.s32 %s10, 2
        // Predicated region
        $region93: #{tpu_custom_call.1} parent=91 // pred_check
          %p1756 = pneg %p133
        $region94: #{tpu_custom_call.1} parent=91 // pred_check_branch
          %1758 = sbr.rel (%p1756) target = $region96
        $region95: #{tpu_custom_call.1} parent=91 // pred_region
          %s1759 = sand.u32 %s118, 1
          %s1760 = sand.u32 %s118, 1
          %s1761 = smul.addr %s1760, 128
          %s1762 = scalar_lea.vmem [#allocation2], %s1761
        $region96: #{tpu_custom_call.1} parent=91 // pred_fallthru
          _
      $region92: #{tpu_custom_call.1} parent=5 // pred_fallthru
        _
    $region6: #{tpu_custom_call.1} parent=1 // loop_footer
      %s14 = sadd.s32 1, %s10
    $region7: #{tpu_custom_call.1} parent=1 // loop_footer_branch
      %9 = sbr.rel target = $region3
    $region8: #{tpu_custom_call.1} parent=1 // loop_exit
      _

</llo_original>
